<compile_context>
chip_gen: v5e
topology: v5e:2x2
jax: 0.10.0
libtpu: 0.0.40
codegen_flags: <defaults>
</compile_context>

<pallas_src>
import functools

import numpy as np
import jax
import jax.numpy as jnp
from jax.experimental import pallas as pl
from jax.experimental.pallas import tpu as pltpu


# --------------------------------------------------------------------------
# fused conv3x3 (pad=1) + bias + ReLU + maxpool 2x2 kernel (one batch / step)
# --------------------------------------------------------------------------
def _conv3x3_relu_pool_kernel(x_ref, w_ref, b_ref, o_ref, *, h, w, cin, cout):
    # x_ref: [h+2, w+2, cin] (padded input, batch dim squeezed)
    # w_ref: [3, 3, cin, cout]   b_ref: [1, cout]   o_ref: [h//2, w//2, cout]
    ho = h // 2
    wo = w // 2
    bias = b_ref[...]

    # one-hot column selectors for the W-direction pool (even / odd columns)
    rj = jax.lax.broadcasted_iota(jnp.int32, (wo, w), 0)
    cj = jax.lax.broadcasted_iota(jnp.int32, (wo, w), 1)
    sel_e = (cj == 2 * rj).astype(jnp.float32)
    sel_o = (cj == 2 * rj + 1).astype(jnp.float32)

    def conv_row(r):  # conv+bias+relu for one output row r -> [w, cout]
        acc = jnp.zeros((w, cout), jnp.float32)
        for dy in range(3):
            xrow = x_ref[r + dy]                    # [w+2, cin]
            for dx in range(3):
                xs = xrow[dx:dx + w, :]             # [w, cin]
                wk = w_ref[dy, dx]                  # [cin, cout]
                if cin == 1:
                    acc = acc + xs * wk             # broadcast (VPU) path
                else:
                    acc = acc + jnp.dot(xs, wk, preferred_element_type=jnp.float32)
        return jnp.maximum(acc + bias, 0.0)

    def body(hp, carry):
        rm = jnp.maximum(conv_row(2 * hp), conv_row(2 * hp + 1))     # H-pool
        pooled = jnp.maximum(                                        # W-pool
            jnp.dot(sel_e, rm, preferred_element_type=jnp.float32),
            jnp.dot(sel_o, rm, preferred_element_type=jnp.float32))
        o_ref[hp] = pooled
        return carry

    jax.lax.fori_loop(0, ho, body, 0)


def conv3x3_relu_pool(x_nhwc, w_oihw, bias):
    bsz, h, w, cin = x_nhwc.shape
    cout = w_oihw.shape[0]
    ho, wo = h // 2, w // 2
    xp = jnp.pad(x_nhwc, ((0, 0), (1, 1), (1, 1), (0, 0)))
    w_t = jnp.transpose(w_oihw, (2, 3, 1, 0))        # [3,3,cin,cout]
    kern = functools.partial(_conv3x3_relu_pool_kernel, h=h, w=w, cin=cin, cout=cout)
    return pl.pallas_call(
        kern,
        grid=(bsz,),
        in_specs=[
            pl.BlockSpec((None, h + 2, w + 2, cin), lambda i: (i, 0, 0, 0)),
            pl.BlockSpec((3, 3, cin, cout), lambda i: (0, 0, 0, 0)),
            pl.BlockSpec((1, cout), lambda i: (0, 0)),
        ],
        out_specs=pl.BlockSpec((None, ho, wo, cout), lambda i: (i, 0, 0, 0)),
        out_shape=jax.ShapeDtypeStruct((bsz, ho, wo, cout), jnp.float32),
        compiler_params=pltpu.CompilerParams(dimension_semantics=("parallel",)),
    )(xp, w_t, bias.reshape(1, cout))


# --------------------------------------------------------------------------
# tiny regressor matmul (+bias, optional input relu)
# --------------------------------------------------------------------------
def _matmul_bias_kernel(x_ref, w_ref, b_ref, o_ref, *, relu_in):
    x = x_ref[...]
    if relu_in:
        x = jnp.maximum(x, 0.0)
    o_ref[...] = jnp.dot(x, w_ref[...], preferred_element_type=jnp.float32) + b_ref[...]


def matmul_bias(x, w, b, *, relu_in=False):
    m = x.shape[0]
    n = w.shape[1]
    return pl.pallas_call(
        functools.partial(_matmul_bias_kernel, relu_in=relu_in),
        out_shape=jax.ShapeDtypeStruct((m, n), jnp.float32),
    )(x, w, b.reshape(1, n))


# --------------------------------------------------------------------------
# affine_grid + grid_sample (bilinear, border, align_corners=False)
# --------------------------------------------------------------------------
def _grid_sample_kernel(theta_ref, xg_ref, yg_ref, imgT_ref, out_ref,
                        *, n, h_in, w_in, channels):
    b = pl.program_id(0)
    t00 = theta_ref[b, 0]
    t01 = theta_ref[b, 1]
    t02 = theta_ref[b, 2]
    t10 = theta_ref[b, 3]
    t11 = theta_ref[b, 4]
    t12 = theta_ref[b, 5]

    xg = xg_ref[...]                                  # [1, n] lane-dense
    yg = yg_ref[...]
    gx = t00 * xg + t01 * yg + t02
    gy = t10 * xg + t11 * yg + t12

    # grid_sample unnormalization (align_corners=False) + border clipping
    ix = jnp.clip(((gx + 1.0) * w_in - 1.0) * 0.5, 0.0, float(w_in - 1))
    iy = jnp.clip(((gy + 1.0) * h_in - 1.0) * 0.5, 0.0, float(h_in - 1))
    x0 = jnp.floor(ix)
    y0 = jnp.floor(iy)
    wx1 = ix - x0
    wx0 = 1.0 - wx1
    wy1 = iy - y0
    wy0 = 1.0 - wy1
    x0i = x0.astype(jnp.int32)
    y0i = y0.astype(jnp.int32)
    x1i = jnp.minimum(x0i + 1, w_in - 1)
    y1i = jnp.minimum(y0i + 1, h_in - 1)

    # fused wy-weighted row one-hot  [h_in, n]
    ysub = jax.lax.broadcasted_iota(jnp.int32, (h_in, n), 0)
    ohy = (jnp.where(ysub == y0i, wy0, 0.0) + jnp.where(ysub == y1i, wy1, 0.0))
    # fused wx-weighted column one-hot  [w_in, n]
    xsub = jax.lax.broadcasted_iota(jnp.int32, (w_in, n), 0)
    xw = (jnp.where(xsub == x0i, wx0, 0.0) + jnp.where(xsub == x1i, wx1, 0.0))

    # one gather matmul for all channels: [C*w_in, h_in] @ [h_in, n]
    g = jnp.dot(imgT_ref[...], ohy, preferred_element_type=jnp.float32)
    for c in range(channels):
        gc = g if channels == 1 else g[c * w_in:(c + 1) * w_in, :]
        out_ref[c] = jnp.sum(gc * xw, axis=0, keepdims=True)        # [1, n]


def grid_sample_affine(batch_I, theta, I_r_size):
    B, C, H, W = batch_I.shape
    H_r, W_r = I_r_size
    n = H_r * W_r
    # F.affine_grid base grid (align_corners=False), precomputed constants
    jj = (2.0 * jnp.arange(W_r, dtype=jnp.float32) + 1.0) / W_r - 1.0
    ii = (2.0 * jnp.arange(H_r, dtype=jnp.float32) + 1.0) / H_r - 1.0
    xg_base = jnp.broadcast_to(jj[None, :], (H_r, W_r)).reshape(1, n)
    yg_base = jnp.broadcast_to(ii[:, None], (H_r, W_r)).reshape(1, n)
    # image presented as [B, C*W, H] so one matmul gathers all channels
    imgT = jnp.transpose(batch_I.astype(jnp.float32), (0, 1, 3, 2)).reshape(B, C * W, H)

    out = pl.pallas_call(
        functools.partial(_grid_sample_kernel, n=n, h_in=H, w_in=W, channels=C),
        grid=(B,),
        in_specs=[
            pl.BlockSpec(memory_space=pltpu.MemorySpace.SMEM),        # theta [B, 6]
            pl.BlockSpec((1, n), lambda b: (0, 0)),                   # xg_base
            pl.BlockSpec((1, n), lambda b: (0, 0)),                   # yg_base
            pl.BlockSpec((None, C * W, H), lambda b: (b, 0, 0)),      # imgT
        ],
        out_specs=pl.BlockSpec((None, C, 1, n), lambda b: (b, 0, 0, 0)),
        out_shape=jax.ShapeDtypeStruct((B, C, 1, n), jnp.float32),
        compiler_params=pltpu.CompilerParams(dimension_semantics=("parallel",)),
    )(theta.astype(jnp.float32), xg_base, yg_base, imgT)
    return out.reshape(B, C, H_r, W_r)


# --------------------------------------------------------------------------
# full module forward
# --------------------------------------------------------------------------
def affine_spatial_transformer(batch_I, params, *, I_r_size):
    B, C, H, W = batch_I.shape
    x = jnp.transpose(batch_I, (0, 2, 3, 1)).astype(jnp.float32)     # NCHW -> NHWC

    # AffineLocalizationNetwork (conv+relu+pool fused per layer)
    x = conv3x3_relu_pool(x, params["w1"], params["b1"])
    x = conv3x3_relu_pool(x, params["w2"], params["b2"])
    x = conv3x3_relu_pool(x, params["w3"], params["b3"])
    x = conv3x3_relu_pool(x, params["w4"], params["b4"])
    # PyTorch flattens NCHW, i.e. (C, H, W) order
    y = jnp.transpose(x, (0, 3, 1, 2)).reshape(B, -1)
    t = matmul_bias(y, params["w_reg"], params["b_reg"], relu_in=True)   # [B, 6]

    # axis-swap juggling of the torch forward -> theta = [[t4,t3,t5],[t1,t0,t2]]
    theta = jnp.stack([t[:, 4], t[:, 3], t[:, 5],
                       t[:, 1], t[:, 0], t[:, 2]], axis=1)               # [B, 6]
    return grid_sample_affine(batch_I.astype(jnp.float32), theta, I_r_size)


# --------------------------------------------------------------------------
# plain-JAX references (for correctness checks only)
# --------------------------------------------------------------------------
def _conv_pool_ref(x_nhwc, w_oihw, bias):
    w_hwio = jnp.transpose(w_oihw, (2, 3, 1, 0))
    y = jax.lax.conv_general_dilated(
        x_nhwc, w_hwio, window_strides=(1, 1), padding=((1, 1), (1, 1)),
        dimension_numbers=("NHWC", "HWIO", "NHWC"),
        precision=jax.lax.Precision.HIGHEST)
    y = jnp.maximum(y + bias[None, None, None, :], 0.0)
    ho, wo = y.shape[1] // 2, y.shape[2] // 2
    y = y[:, :2 * ho, :2 * wo, :]
    return jnp.maximum(jnp.maximum(y[:, 0::2, 0::2], y[:, 0::2, 1::2]),
                       jnp.maximum(y[:, 1::2, 0::2], y[:, 1::2, 1::2]))


def _grid_sample_ref(img, theta, I_r_size):
    B, C, H, W = img.shape
    H_r, W_r = I_r_size
    jj = (2.0 * jnp.arange(W_r, dtype=jnp.float32) + 1.0) / W_r - 1.0
    ii = (2.0 * jnp.arange(H_r, dtype=jnp.float32) + 1.0) / H_r - 1.0
    xg = jnp.broadcast_to(jj[None, :], (H_r, W_r))
    yg = jnp.broadcast_to(ii[:, None], (H_r, W_r))
    th = theta.reshape(B, 2, 3)
    gx = th[:, 0, 0, None, None] * xg + th[:, 0, 1, None, None] * yg + th[:, 0, 2, None, None]
    gy = th[:, 1, 0, None, None] * xg + th[:, 1, 1, None, None] * yg + th[:, 1, 2, None, None]
    ix = jnp.clip(((gx + 1.0) * W - 1.0) * 0.5, 0.0, W - 1)
    iy = jnp.clip(((gy + 1.0) * H - 1.0) * 0.5, 0.0, H - 1)
    x0 = jnp.floor(ix)
    y0 = jnp.floor(iy)
    wx1 = ix - x0
    wy1 = iy - y0
    x0i = x0.astype(jnp.int32)
    y0i = y0.astype(jnp.int32)
    x1i = jnp.minimum(x0i + 1, W - 1)
    y1i = jnp.minimum(y0i + 1, H - 1)
    bidx = jnp.arange(B)[:, None, None, None]
    cidx = jnp.arange(C)[None, :, None, None]

    def gather(yi, xi):
        return img[bidx, cidx, yi[:, None], xi[:, None]]

    v00, v01 = gather(y0i, x0i), gather(y0i, x1i)
    v10, v11 = gather(y1i, x0i), gather(y1i, x1i)
    wx1b, wy1b = wx1[:, None], wy1[:, None]
    return ((1.0 - wy1b) * ((1.0 - wx1b) * v00 + wx1b * v01)
            + wy1b * ((1.0 - wx1b) * v10 + wx1b * v11))


# --------------------------------------------------------------------------
# deterministic params
# --------------------------------------------------------------------------
def _conv_init(key, cin, cout):
    kw, kb = jax.random.split(key)
    bound = 1.0 / float(np.sqrt(cin * 9))
    w = jax.random.uniform(kw, (cout, cin, 3, 3), jnp.float32, -bound, bound)
    b = jax.random.uniform(kb, (cout,), jnp.float32, -bound, bound)
    return w, b


def make_params(key, in_channels):
    ks = jax.random.split(key, 4)
    params = {}
    params["w1"], params["b1"] = _conv_init(ks[0], in_channels, 48)
    params["w2"], params["b2"] = _conv_init(ks[1], 48, 48)
    params["w3"], params["b3"] = _conv_init(ks[2], 48, 64)
    params["w4"], params["b4"] = _conv_init(ks[3], 64, 64)
    # nn.Linear(768, 6): weight filled with 0, bias = [1,0,0,0,1,0]
    params["w_reg"] = jnp.zeros((768, 6), jnp.float32)
    params["b_reg"] = jnp.array([1.0, 0.0, 0.0, 0.0, 1.0, 0.0], jnp.float32)
    return params


if __name__ == "__main__":
    B, C, H, W = 2, 1, 32, 100          # I_size=(32,100) so flattened dim = 768
    I_r_size = (32, 100)

    key = jax.random.PRNGKey(0)
    k_params, k_data = jax.random.split(key)
    params = make_params(k_params, C)
    batch_I = jax.random.uniform(k_data, (B, C, H, W), jnp.float32)

    # 1) localization conv stack vs XLA reference
    got = jnp.transpose(batch_I, (0, 2, 3, 1))
    ref = got
    for i in (1, 2, 3, 4):
        got = conv3x3_relu_pool(got, params[f"w{i}"], params[f"b{i}"])
        ref = _conv_pool_ref(ref, params[f"w{i}"], params[f"b{i}"])
    got, ref = jax.block_until_ready((got, ref))
    np.testing.assert_allclose(np.asarray(got), np.asarray(ref), atol=2e-2, rtol=2e-2)

    # 2) grid_sample kernel vs plain-JAX reference with a non-identity affine
    theta_test = jnp.array([[0.90, 0.08, 0.05, -0.06, 0.95, -0.10],
                            [1.05, -0.10, -0.08, 0.07, 0.90, 0.12]], jnp.float32)
    samp = jax.block_until_ready(grid_sample_affine(batch_I, theta_test, I_r_size))
    samp_ref = _grid_sample_ref(batch_I, theta_test, I_r_size)
    np.testing.assert_allclose(np.asarray(samp), np.asarray(samp_ref), atol=2e-3, rtol=0)

    # 3) full forward; with loc_reg weight = 0 and bias = [1,0,0,0,1,0] the
    #    predicted affine is identity, so (I_r_size == I_size) reproduces input.
    fwd = jax.jit(functools.partial(affine_spatial_transformer, I_r_size=I_r_size))
    out = fwd(batch_I, params)
    jax.block_until_ready(out)
    assert out.shape == (B, C, I_r_size[0], I_r_size[1]), out.shape
    np.testing.assert_allclose(np.asarray(out), np.asarray(batch_I), atol=2e-3)
    print("KERNEL_OK")
</pallas_src>

<mosaic_0001>
module attributes {stable_mosaic.version = 11 : i64} {
  func.func @_conv3x3_relu_pool_kernel(%arg0: i32, %arg1: memref<1x34x102x1xf32, #tpu.memory_space<vmem>>, %arg2: memref<3x3x1x48xf32, #tpu.memory_space<vmem>>, %arg3: memref<1x48xf32, #tpu.memory_space<vmem>>, %arg4: memref<1x16x50x48xf32, #tpu.memory_space<vmem>>) attributes {dimension_semantics = [#tpu.dimension_semantics<parallel>], iteration_bounds = array<i64: 2>, scalar_prefetch = 0 : i64, scratch_operands = 0 : i64, tpu.core_type = #tpu.core_type<tc>, window_params = [{transform_indices = @transform_0, window_bounds = array<i64: 1, 34, 102, 1>}, {pipeline_mode = #tpu.pipeline_mode<synchronous>, transform_indices = @transform_1, window_bounds = array<i64: 3, 3, 1, 48>}, {pipeline_mode = #tpu.pipeline_mode<synchronous>, transform_indices = @transform_2, window_bounds = array<i64: 1, 48>}, {transform_indices = @transform_3, window_bounds = array<i64: 1, 16, 50, 48>}]} {
    %c0 = arith.constant 0 : index
    %c0_0 = arith.constant 0 : index
    %0 = vector.load %arg3[%c0, %c0_0] : memref<1x48xf32, #tpu.memory_space<vmem>>, vector<1x48xf32>
    %1 = tpu.iota {dimensions = array<i32: 0>} : vector<50x100xi32>
    %2 = tpu.iota {dimensions = array<i32: 1>} : vector<50x100xi32>
    %c2_i32 = arith.constant 2 : i32
    %3 = vector.broadcast %c2_i32 : i32 to vector<50x100xi32>
    %4 = arith.muli %3, %1 : vector<50x100xi32>
    %5 = arith.cmpi eq, %2, %4 : vector<50x100xi32>
    %6 = arith.extui %5 : vector<50x100xi1> to vector<50x100xi32>
    %7 = arith.sitofp %6 : vector<50x100xi32> to vector<50x100xf32>
    %c2_i32_1 = arith.constant 2 : i32
    %8 = vector.broadcast %c2_i32_1 : i32 to vector<50x100xi32>
    %9 = arith.muli %8, %1 : vector<50x100xi32>
    %c1_i32 = arith.constant 1 : i32
    %10 = vector.broadcast %c1_i32 : i32 to vector<50x100xi32>
    %11 = arith.addi %9, %10 : vector<50x100xi32>
    %12 = arith.cmpi eq, %2, %11 : vector<50x100xi32>
    %13 = arith.extui %12 : vector<50x100xi1> to vector<50x100xi32>
    %14 = arith.sitofp %13 : vector<50x100xi32> to vector<50x100xf32>
    %c0_i32 = arith.constant 0 : i32
    %c16_i32 = arith.constant 16 : i32
    %15 = arith.addi %c0_i32, %c16_i32 : i32
    %c1_i32_2 = arith.constant 1 : i32
    scf.for %arg5 = %c0_i32 to %15 step %c1_i32_2  : i32 {
      %c2_i32_4 = arith.constant 2 : i32
      %16 = arith.muli %c2_i32_4, %arg5 : i32
      %cst = arith.constant 0.000000e+00 : f32
      %17 = vector.broadcast %cst : f32 to vector<100x48xf32>
      %c0_i32_5 = arith.constant 0 : i32
      %18 = arith.addi %16, %c0_i32_5 : i32
      %c0_6 = arith.constant 0 : index
      %19 = arith.index_cast %18 : i32 to index
      %c0_7 = arith.constant 0 : index
      %c0_8 = arith.constant 0 : index
      %20 = vector.load %arg1[%c0_6, %19, %c0_7, %c0_8] : memref<1x34x102x1xf32, #tpu.memory_space<vmem>>, vector<1x1x102x1xf32>
      %21 = vector.shape_cast %20 : vector<1x1x102x1xf32> to vector<102x1xf32>
      %22 = vector.extract_strided_slice %21 {offsets = [0, 0], sizes = [100, 1], strides = [1, 1]} : vector<102x1xf32> to vector<100x1xf32>
      %c0_9 = arith.constant 0 : index
      %c0_10 = arith.constant 0 : index
      %c0_11 = arith.constant 0 : index
      %c0_12 = arith.constant 0 : index
      %23 = vector.load %arg2[%c0_9, %c0_10, %c0_11, %c0_12] : memref<3x3x1x48xf32, #tpu.memory_space<vmem>>, vector<1x1x1x48xf32>
      %24 = vector.shape_cast %23 : vector<1x1x1x48xf32> to vector<1x48xf32>
      %25 = vector.broadcast %22 : vector<100x1xf32> to vector<100x48xf32>
      %26 = vector.broadcast %24 : vector<1x48xf32> to vector<100x48xf32>
      %27 = arith.mulf %25, %26 : vector<100x48xf32>
      %28 = arith.addf %17, %27 : vector<100x48xf32>
      %29 = vector.extract_strided_slice %21 {offsets = [1, 0], sizes = [100, 1], strides = [1, 1]} : vector<102x1xf32> to vector<100x1xf32>
      %c0_13 = arith.constant 0 : index
      %c1 = arith.constant 1 : index
      %c0_14 = arith.constant 0 : index
      %c0_15 = arith.constant 0 : index
      %30 = vector.load %arg2[%c0_13, %c1, %c0_14, %c0_15] : memref<3x3x1x48xf32, #tpu.memory_space<vmem>>, vector<1x1x1x48xf32>
      %31 = vector.shape_cast %30 : vector<1x1x1x48xf32> to vector<1x48xf32>
      %32 = vector.broadcast %29 : vector<100x1xf32> to vector<100x48xf32>
      %33 = vector.broadcast %31 : vector<1x48xf32> to vector<100x48xf32>
      %34 = arith.mulf %32, %33 : vector<100x48xf32>
      %35 = arith.addf %28, %34 : vector<100x48xf32>
      %36 = vector.extract_strided_slice %21 {offsets = [2, 0], sizes = [100, 1], strides = [1, 1]} : vector<102x1xf32> to vector<100x1xf32>
      %c0_16 = arith.constant 0 : index
      %c2 = arith.constant 2 : index
      %c0_17 = arith.constant 0 : index
      %c0_18 = arith.constant 0 : index
      %37 = vector.load %arg2[%c0_16, %c2, %c0_17, %c0_18] : memref<3x3x1x48xf32, #tpu.memory_space<vmem>>, vector<1x1x1x48xf32>
      %38 = vector.shape_cast %37 : vector<1x1x1x48xf32> to vector<1x48xf32>
      %39 = vector.broadcast %36 : vector<100x1xf32> to vector<100x48xf32>
      %40 = vector.broadcast %38 : vector<1x48xf32> to vector<100x48xf32>
      %41 = arith.mulf %39, %40 : vector<100x48xf32>
      %42 = arith.addf %35, %41 : vector<100x48xf32>
      %c1_i32_19 = arith.constant 1 : i32
      %43 = arith.addi %16, %c1_i32_19 : i32
      %c0_20 = arith.constant 0 : index
      %44 = arith.index_cast %43 : i32 to index
      %c0_21 = arith.constant 0 : index
      %c0_22 = arith.constant 0 : index
      %45 = vector.load %arg1[%c0_20, %44, %c0_21, %c0_22] : memref<1x34x102x1xf32, #tpu.memory_space<vmem>>, vector<1x1x102x1xf32>
      %46 = vector.shape_cast %45 : vector<1x1x102x1xf32> to vector<102x1xf32>
      %47 = vector.extract_strided_slice %46 {offsets = [0, 0], sizes = [100, 1], strides = [1, 1]} : vector<102x1xf32> to vector<100x1xf32>
      %c1_23 = arith.constant 1 : index
      %c0_24 = arith.constant 0 : index
      %c0_25 = arith.constant 0 : index
      %c0_26 = arith.constant 0 : index
      %48 = vector.load %arg2[%c1_23, %c0_24, %c0_25, %c0_26] : memref<3x3x1x48xf32, #tpu.memory_space<vmem>>, vector<1x1x1x48xf32>
      %49 = vector.shape_cast %48 : vector<1x1x1x48xf32> to vector<1x48xf32>
      %50 = vector.broadcast %47 : vector<100x1xf32> to vector<100x48xf32>
      %51 = vector.broadcast %49 : vector<1x48xf32> to vector<100x48xf32>
      %52 = arith.mulf %50, %51 : vector<100x48xf32>
      %53 = arith.addf %42, %52 : vector<100x48xf32>
      %54 = vector.extract_strided_slice %46 {offsets = [1, 0], sizes = [100, 1], strides = [1, 1]} : vector<102x1xf32> to vector<100x1xf32>
      %c1_27 = arith.constant 1 : index
      %c1_28 = arith.constant 1 : index
      %c0_29 = arith.constant 0 : index
      %c0_30 = arith.constant 0 : index
      %55 = vector.load %arg2[%c1_27, %c1_28, %c0_29, %c0_30] : memref<3x3x1x48xf32, #tpu.memory_space<vmem>>, vector<1x1x1x48xf32>
      %56 = vector.shape_cast %55 : vector<1x1x1x48xf32> to vector<1x48xf32>
      %57 = vector.broadcast %54 : vector<100x1xf32> to vector<100x48xf32>
      %58 = vector.broadcast %56 : vector<1x48xf32> to vector<100x48xf32>
      %59 = arith.mulf %57, %58 : vector<100x48xf32>
      %60 = arith.addf %53, %59 : vector<100x48xf32>
      %61 = vector.extract_strided_slice %46 {offsets = [2, 0], sizes = [100, 1], strides = [1, 1]} : vector<102x1xf32> to vector<100x1xf32>
      %c1_31 = arith.constant 1 : index
      %c2_32 = arith.constant 2 : index
      %c0_33 = arith.constant 0 : index
      %c0_34 = arith.constant 0 : index
      %62 = vector.load %arg2[%c1_31, %c2_32, %c0_33, %c0_34] : memref<3x3x1x48xf32, #tpu.memory_space<vmem>>, vector<1x1x1x48xf32>
      %63 = vector.shape_cast %62 : vector<1x1x1x48xf32> to vector<1x48xf32>
      %64 = vector.broadcast %61 : vector<100x1xf32> to vector<100x48xf32>
      %65 = vector.broadcast %63 : vector<1x48xf32> to vector<100x48xf32>
      %66 = arith.mulf %64, %65 : vector<100x48xf32>
      %67 = arith.addf %60, %66 : vector<100x48xf32>
      %c2_i32_35 = arith.constant 2 : i32
      %68 = arith.addi %16, %c2_i32_35 : i32
      %c0_36 = arith.constant 0 : index
      %69 = arith.index_cast %68 : i32 to index
      %c0_37 = arith.constant 0 : index
      %c0_38 = arith.constant 0 : index
      %70 = vector.load %arg1[%c0_36, %69, %c0_37, %c0_38] : memref<1x34x102x1xf32, #tpu.memory_space<vmem>>, vector<1x1x102x1xf32>
      %71 = vector.shape_cast %70 : vector<1x1x102x1xf32> to vector<102x1xf32>
      %72 = vector.extract_strided_slice %71 {offsets = [0, 0], sizes = [100, 1], strides = [1, 1]} : vector<102x1xf32> to vector<100x1xf32>
      %c2_39 = arith.constant 2 : index
      %c0_40 = arith.constant 0 : index
      %c0_41 = arith.constant 0 : index
      %c0_42 = arith.constant 0 : index
      %73 = vector.load %arg2[%c2_39, %c0_40, %c0_41, %c0_42] : memref<3x3x1x48xf32, #tpu.memory_space<vmem>>, vector<1x1x1x48xf32>
      %74 = vector.shape_cast %73 : vector<1x1x1x48xf32> to vector<1x48xf32>
      %75 = vector.broadcast %72 : vector<100x1xf32> to vector<100x48xf32>
      %76 = vector.broadcast %74 : vector<1x48xf32> to vector<100x48xf32>
      %77 = arith.mulf %75, %76 : vector<100x48xf32>
      %78 = arith.addf %67, %77 : vector<100x48xf32>
      %79 = vector.extract_strided_slice %71 {offsets = [1, 0], sizes = [100, 1], strides = [1, 1]} : vector<102x1xf32> to vector<100x1xf32>
      %c2_43 = arith.constant 2 : index
      %c1_44 = arith.constant 1 : index
      %c0_45 = arith.constant 0 : index
      %c0_46 = arith.constant 0 : index
      %80 = vector.load %arg2[%c2_43, %c1_44, %c0_45, %c0_46] : memref<3x3x1x48xf32, #tpu.memory_space<vmem>>, vector<1x1x1x48xf32>
      %81 = vector.shape_cast %80 : vector<1x1x1x48xf32> to vector<1x48xf32>
      %82 = vector.broadcast %79 : vector<100x1xf32> to vector<100x48xf32>
      %83 = vector.broadcast %81 : vector<1x48xf32> to vector<100x48xf32>
      %84 = arith.mulf %82, %83 : vector<100x48xf32>
      %85 = arith.addf %78, %84 : vector<100x48xf32>
      %86 = vector.extract_strided_slice %71 {offsets = [2, 0], sizes = [100, 1], strides = [1, 1]} : vector<102x1xf32> to vector<100x1xf32>
      %c2_47 = arith.constant 2 : index
      %c2_48 = arith.constant 2 : index
      %c0_49 = arith.constant 0 : index
      %c0_50 = arith.constant 0 : index
      %87 = vector.load %arg2[%c2_47, %c2_48, %c0_49, %c0_50] : memref<3x3x1x48xf32, #tpu.memory_space<vmem>>, vector<1x1x1x48xf32>
      %88 = vector.shape_cast %87 : vector<1x1x1x48xf32> to vector<1x48xf32>
      %89 = vector.broadcast %86 : vector<100x1xf32> to vector<100x48xf32>
      %90 = vector.broadcast %88 : vector<1x48xf32> to vector<100x48xf32>
      %91 = arith.mulf %89, %90 : vector<100x48xf32>
      %92 = arith.addf %85, %91 : vector<100x48xf32>
      %93 = vector.broadcast %0 : vector<1x48xf32> to vector<100x48xf32>
      %94 = arith.addf %92, %93 : vector<100x48xf32>
      %cst_51 = arith.constant 0.000000e+00 : f32
      %95 = vector.broadcast %cst_51 : f32 to vector<100x48xf32>
      %96 = arith.maximumf %94, %95 : vector<100x48xf32>
      %c2_i32_52 = arith.constant 2 : i32
      %97 = arith.muli %c2_i32_52, %arg5 : i32
      %c1_i32_53 = arith.constant 1 : i32
      %98 = arith.addi %97, %c1_i32_53 : i32
      %cst_54 = arith.constant 0.000000e+00 : f32
      %99 = vector.broadcast %cst_54 : f32 to vector<100x48xf32>
      %c0_i32_55 = arith.constant 0 : i32
      %100 = arith.addi %98, %c0_i32_55 : i32
      %c0_56 = arith.constant 0 : index
      %101 = arith.index_cast %100 : i32 to index
      %c0_57 = arith.constant 0 : index
      %c0_58 = arith.constant 0 : index
      %102 = vector.load %arg1[%c0_56, %101, %c0_57, %c0_58] : memref<1x34x102x1xf32, #tpu.memory_space<vmem>>, vector<1x1x102x1xf32>
      %103 = vector.shape_cast %102 : vector<1x1x102x1xf32> to vector<102x1xf32>
      %104 = vector.extract_strided_slice %103 {offsets = [0, 0], sizes = [100, 1], strides = [1, 1]} : vector<102x1xf32> to vector<100x1xf32>
      %c0_59 = arith.constant 0 : index
      %c0_60 = arith.constant 0 : index
      %c0_61 = arith.constant 0 : index
      %c0_62 = arith.constant 0 : index
      %105 = vector.load %arg2[%c0_59, %c0_60, %c0_61, %c0_62] : memref<3x3x1x48xf32, #tpu.memory_space<vmem>>, vector<1x1x1x48xf32>
      %106 = vector.shape_cast %105 : vector<1x1x1x48xf32> to vector<1x48xf32>
      %107 = vector.broadcast %104 : vector<100x1xf32> to vector<100x48xf32>
      %108 = vector.broadcast %106 : vector<1x48xf32> to vector<100x48xf32>
      %109 = arith.mulf %107, %108 : vector<100x48xf32>
      %110 = arith.addf %99, %109 : vector<100x48xf32>
      %111 = vector.extract_strided_slice %103 {offsets = [1, 0], sizes = [100, 1], strides = [1, 1]} : vector<102x1xf32> to vector<100x1xf32>
      %c0_63 = arith.constant 0 : index
      %c1_64 = arith.constant 1 : index
      %c0_65 = arith.constant 0 : index
      %c0_66 = arith.constant 0 : index
      %112 = vector.load %arg2[%c0_63, %c1_64, %c0_65, %c0_66] : memref<3x3x1x48xf32, #tpu.memory_space<vmem>>, vector<1x1x1x48xf32>
      %113 = vector.shape_cast %112 : vector<1x1x1x48xf32> to vector<1x48xf32>
      %114 = vector.broadcast %111 : vector<100x1xf32> to vector<100x48xf32>
      %115 = vector.broadcast %113 : vector<1x48xf32> to vector<100x48xf32>
      %116 = arith.mulf %114, %115 : vector<100x48xf32>
      %117 = arith.addf %110, %116 : vector<100x48xf32>
      %118 = vector.extract_strided_slice %103 {offsets = [2, 0], sizes = [100, 1], strides = [1, 1]} : vector<102x1xf32> to vector<100x1xf32>
      %c0_67 = arith.constant 0 : index
      %c2_68 = arith.constant 2 : index
      %c0_69 = arith.constant 0 : index
      %c0_70 = arith.constant 0 : index
      %119 = vector.load %arg2[%c0_67, %c2_68, %c0_69, %c0_70] : memref<3x3x1x48xf32, #tpu.memory_space<vmem>>, vector<1x1x1x48xf32>
      %120 = vector.shape_cast %119 : vector<1x1x1x48xf32> to vector<1x48xf32>
      %121 = vector.broadcast %118 : vector<100x1xf32> to vector<100x48xf32>
      %122 = vector.broadcast %120 : vector<1x48xf32> to vector<100x48xf32>
      %123 = arith.mulf %121, %122 : vector<100x48xf32>
      %124 = arith.addf %117, %123 : vector<100x48xf32>
      %c1_i32_71 = arith.constant 1 : i32
      %125 = arith.addi %98, %c1_i32_71 : i32
      %c0_72 = arith.constant 0 : index
      %126 = arith.index_cast %125 : i32 to index
      %c0_73 = arith.constant 0 : index
      %c0_74 = arith.constant 0 : index
      %127 = vector.load %arg1[%c0_72, %126, %c0_73, %c0_74] : memref<1x34x102x1xf32, #tpu.memory_space<vmem>>, vector<1x1x102x1xf32>
      %128 = vector.shape_cast %127 : vector<1x1x102x1xf32> to vector<102x1xf32>
      %129 = vector.extract_strided_slice %128 {offsets = [0, 0], sizes = [100, 1], strides = [1, 1]} : vector<102x1xf32> to vector<100x1xf32>
      %c1_75 = arith.constant 1 : index
      %c0_76 = arith.constant 0 : index
      %c0_77 = arith.constant 0 : index
      %c0_78 = arith.constant 0 : index
      %130 = vector.load %arg2[%c1_75, %c0_76, %c0_77, %c0_78] : memref<3x3x1x48xf32, #tpu.memory_space<vmem>>, vector<1x1x1x48xf32>
      %131 = vector.shape_cast %130 : vector<1x1x1x48xf32> to vector<1x48xf32>
      %132 = vector.broadcast %129 : vector<100x1xf32> to vector<100x48xf32>
      %133 = vector.broadcast %131 : vector<1x48xf32> to vector<100x48xf32>
      %134 = arith.mulf %132, %133 : vector<100x48xf32>
      %135 = arith.addf %124, %134 : vector<100x48xf32>
      %136 = vector.extract_strided_slice %128 {offsets = [1, 0], sizes = [100, 1], strides = [1, 1]} : vector<102x1xf32> to vector<100x1xf32>
      %c1_79 = arith.constant 1 : index
      %c1_80 = arith.constant 1 : index
      %c0_81 = arith.constant 0 : index
      %c0_82 = arith.constant 0 : index
      %137 = vector.load %arg2[%c1_79, %c1_80, %c0_81, %c0_82] : memref<3x3x1x48xf32, #tpu.memory_space<vmem>>, vector<1x1x1x48xf32>
      %138 = vector.shape_cast %137 : vector<1x1x1x48xf32> to vector<1x48xf32>
      %139 = vector.broadcast %136 : vector<100x1xf32> to vector<100x48xf32>
      %140 = vector.broadcast %138 : vector<1x48xf32> to vector<100x48xf32>
      %141 = arith.mulf %139, %140 : vector<100x48xf32>
      %142 = arith.addf %135, %141 : vector<100x48xf32>
      %143 = vector.extract_strided_slice %128 {offsets = [2, 0], sizes = [100, 1], strides = [1, 1]} : vector<102x1xf32> to vector<100x1xf32>
      %c1_83 = arith.constant 1 : index
      %c2_84 = arith.constant 2 : index
      %c0_85 = arith.constant 0 : index
      %c0_86 = arith.constant 0 : index
      %144 = vector.load %arg2[%c1_83, %c2_84, %c0_85, %c0_86] : memref<3x3x1x48xf32, #tpu.memory_space<vmem>>, vector<1x1x1x48xf32>
      %145 = vector.shape_cast %144 : vector<1x1x1x48xf32> to vector<1x48xf32>
      %146 = vector.broadcast %143 : vector<100x1xf32> to vector<100x48xf32>
      %147 = vector.broadcast %145 : vector<1x48xf32> to vector<100x48xf32>
      %148 = arith.mulf %146, %147 : vector<100x48xf32>
      %149 = arith.addf %142, %148 : vector<100x48xf32>
      %c2_i32_87 = arith.constant 2 : i32
      %150 = arith.addi %98, %c2_i32_87 : i32
      %c0_88 = arith.constant 0 : index
      %151 = arith.index_cast %150 : i32 to index
      %c0_89 = arith.constant 0 : index
      %c0_90 = arith.constant 0 : index
      %152 = vector.load %arg1[%c0_88, %151, %c0_89, %c0_90] : memref<1x34x102x1xf32, #tpu.memory_space<vmem>>, vector<1x1x102x1xf32>
      %153 = vector.shape_cast %152 : vector<1x1x102x1xf32> to vector<102x1xf32>
      %154 = vector.extract_strided_slice %153 {offsets = [0, 0], sizes = [100, 1], strides = [1, 1]} : vector<102x1xf32> to vector<100x1xf32>
      %c2_91 = arith.constant 2 : index
      %c0_92 = arith.constant 0 : index
      %c0_93 = arith.constant 0 : index
      %c0_94 = arith.constant 0 : index
      %155 = vector.load %arg2[%c2_91, %c0_92, %c0_93, %c0_94] : memref<3x3x1x48xf32, #tpu.memory_space<vmem>>, vector<1x1x1x48xf32>
      %156 = vector.shape_cast %155 : vector<1x1x1x48xf32> to vector<1x48xf32>
      %157 = vector.broadcast %154 : vector<100x1xf32> to vector<100x48xf32>
      %158 = vector.broadcast %156 : vector<1x48xf32> to vector<100x48xf32>
      %159 = arith.mulf %157, %158 : vector<100x48xf32>
      %160 = arith.addf %149, %159 : vector<100x48xf32>
      %161 = vector.extract_strided_slice %153 {offsets = [1, 0], sizes = [100, 1], strides = [1, 1]} : vector<102x1xf32> to vector<100x1xf32>
      %c2_95 = arith.constant 2 : index
      %c1_96 = arith.constant 1 : index
      %c0_97 = arith.constant 0 : index
      %c0_98 = arith.constant 0 : index
      %162 = vector.load %arg2[%c2_95, %c1_96, %c0_97, %c0_98] : memref<3x3x1x48xf32, #tpu.memory_space<vmem>>, vector<1x1x1x48xf32>
      %163 = vector.shape_cast %162 : vector<1x1x1x48xf32> to vector<1x48xf32>
      %164 = vector.broadcast %161 : vector<100x1xf32> to vector<100x48xf32>
      %165 = vector.broadcast %163 : vector<1x48xf32> to vector<100x48xf32>
      %166 = arith.mulf %164, %165 : vector<100x48xf32>
      %167 = arith.addf %160, %166 : vector<100x48xf32>
      %168 = vector.extract_strided_slice %153 {offsets = [2, 0], sizes = [100, 1], strides = [1, 1]} : vector<102x1xf32> to vector<100x1xf32>
      %c2_99 = arith.constant 2 : index
      %c2_100 = arith.constant 2 : index
      %c0_101 = arith.constant 0 : index
      %c0_102 = arith.constant 0 : index
      %169 = vector.load %arg2[%c2_99, %c2_100, %c0_101, %c0_102] : memref<3x3x1x48xf32, #tpu.memory_space<vmem>>, vector<1x1x1x48xf32>
      %170 = vector.shape_cast %169 : vector<1x1x1x48xf32> to vector<1x48xf32>
      %171 = vector.broadcast %168 : vector<100x1xf32> to vector<100x48xf32>
      %172 = vector.broadcast %170 : vector<1x48xf32> to vector<100x48xf32>
      %173 = arith.mulf %171, %172 : vector<100x48xf32>
      %174 = arith.addf %167, %173 : vector<100x48xf32>
      %175 = vector.broadcast %0 : vector<1x48xf32> to vector<100x48xf32>
      %176 = arith.addf %174, %175 : vector<100x48xf32>
      %cst_103 = arith.constant 0.000000e+00 : f32
      %177 = vector.broadcast %cst_103 : f32 to vector<100x48xf32>
      %178 = arith.maximumf %176, %177 : vector<100x48xf32>
      %179 = arith.maximumf %96, %178 : vector<100x48xf32>
      %cst_104 = arith.constant dense<0.000000e+00> : vector<50x48xf32>
      %180 = tpu.matmul %7, %179, %cst_104 {dimension_numbers = #tpu.dot_dimension_numbers<[1], [0], [0], [1], [0, 0, 1, 1], [], []>} : vector<50x100xf32>, vector<100x48xf32>, vector<50x48xf32> -> vector<50x48xf32>
      %cst_105 = arith.constant dense<0.000000e+00> : vector<50x48xf32>
      %181 = tpu.matmul %14, %179, %cst_105 {dimension_numbers = #tpu.dot_dimension_numbers<[1], [0], [0], [1], [0, 0, 1, 1], [], []>} : vector<50x100xf32>, vector<100x48xf32>, vector<50x48xf32> -> vector<50x48xf32>
      %182 = arith.maximumf %180, %181 : vector<50x48xf32>
      %c0_106 = arith.constant 0 : index
      %183 = arith.index_cast %arg5 : i32 to index
      %c0_107 = arith.constant 0 : index
      %c0_108 = arith.constant 0 : index
      %184 = vector.load %arg4[%c0_106, %183, %c0_107, %c0_108] : memref<1x16x50x48xf32, #tpu.memory_space<vmem>>, vector<1x1x50x48xf32>
      %185 = vector.shape_cast %184 : vector<1x1x50x48xf32> to vector<50x48xf32>
      %186 = vector.shape_cast %182 : vector<50x48xf32> to vector<1x1x50x48xf32>
      tpu.vector_store %arg4[%c0_106, %183, %c0_107, %c0_108], %186 {strides = array<i32>} : memref<1x16x50x48xf32, #tpu.memory_space<vmem>>, vector<1x1x50x48xf32>,
    }
    %c16_i32_3 = arith.constant 16 : i32
    return
  }
  func.func @transform_0(%arg0: i32) -> (i32, i32, i32, i32) {
    %c0_i32 = arith.constant 0 : i32
    %c0_i32_0 = arith.constant 0 : i32
    %c0_i32_1 = arith.constant 0 : i32
    %c0_i32_2 = arith.constant 0 : i32
    return %arg0, %c0_i32, %c0_i32_0, %c0_i32_1 : i32, i32, i32, i32
  }
  func.func @transform_1(%arg0: i32) -> (i32, i32, i32, i32) {
    %c0_i32 = arith.constant 0 : i32
    %c0_i32_0 = arith.constant 0 : i32
    %c0_i32_1 = arith.constant 0 : i32
    %c0_i32_2 = arith.constant 0 : i32
    %c0_i32_3 = arith.constant 0 : i32
    return %c0_i32, %c0_i32_0, %c0_i32_1, %c0_i32_2 : i32, i32, i32, i32
  }
  func.func @transform_2(%arg0: i32) -> (i32, i32) {
    %c0_i32 = arith.constant 0 : i32
    %c0_i32_0 = arith.constant 0 : i32
    %c0_i32_1 = arith.constant 0 : i32
    return %c0_i32, %c0_i32_0 : i32, i32
  }
  func.func @transform_3(%arg0: i32) -> (i32, i32, i32, i32) {
    %c0_i32 = arith.constant 0 : i32
    %c0_i32_0 = arith.constant 0 : i32
    %c0_i32_1 = arith.constant 0 : i32
    %c0_i32_2 = arith.constant 0 : i32
    return %arg0, %c0_i32, %c0_i32_0, %c0_i32_1 : i32, i32, i32, i32
  }
}

</mosaic_0001>

<llo_original>
// kernel: tpu_custom_call.1
$region0: #{tpu_custom_call.1}
  #allocation0 [shape = 'u32[]', space=smem, size = 0x4, offset = 0x4, fixed_abs, tag = 'smem constant byte address 0x4 - core index']
  #allocation1 [shape = 'u32[72,128]{1,0:T(1,128)}', space=vmem, size = 0x9000, scoped, tag = 'internal scratch']
  %s0 = inlined_call_operand.vmem [shape: f32[2,34,102,1], index: 0, kind: input, shape index: {}]
  %s1 = inlined_call_operand.vmem [shape: f32[3,3,1,48], index: 1, kind: input, shape index: {}]
  %s2 = inlined_call_operand.vmem [shape: f32[1,48], index: 2, kind: input, shape index: {}]
  %s3 = inlined_call_operand.vmem [shape: f32[2,16,50,48], index: 3, kind: output, shape index: {}]
  %s4 = sld [smem:[#allocation0]]
  $region52: #{tpu_custom_call.1} parent=0
    _
  %s6 = ssub.s32 1, %s4
  %s7 = scalar_select 0, %s6, %s4
  loop: start=0, step=1, limit=4
  $region2: #{tpu_custom_call.1} parent=0 // loop_pre_header
    _
  $region3: #{tpu_custom_call.1} parent=0 // loop_header
    %s9 = sphi 0, %s13
    %p10 = scmp.ge.s32.totalorder %s9, 4
    %s19 = sphi 0, %s21
    %s22 = sphi 0, %s19
    %s23 = sphi 0, %s22
    %s39 = sphi 0, %s23
    %s43 = sphi 0, %s43
    %s45 = sphi 0, %s43
    %s46 = sphi 0, %s45
    %s60 = sphi 0, %s46
    %s64 = sphi 0, %s64
    %s66 = sphi 0, %s64
    %s67 = sphi 0, %s66
    %s81 = sphi 0, %s67
    %s87 = sphi 0, %s89
    %s90 = sphi 0, %s87
    %s91 = sphi 0, %s90
    %s107 = sphi 0, %s91
  $region4: #{tpu_custom_call.1} parent=0 // loop_header_branch
    %12 = sbr.rel (%p10) target = $region8
  $region5: #{tpu_custom_call.1} parent=0 // loop_body
    %s14 = ssub.s32 %s9, 1
    %s15 = ssub.s32 %s9, 2
    %s16 = sadd.s32 %s9, 1
    %s17 = ssub.s32 %s9, %s16
    %p18 = scmp.eq.s32.totalorder %s17, 0
    %s20 = sadd.s32 %s19, 1
    %s21 = scalar_select %p18, %s19, %s20
    %p24 = pneg %p18
    %p25 = scmp.eq.s32.totalorder %s9, 1
    %p26 = por %p24, %p25
    %p27 = scmp.ne.s32.totalorder %s19, %s22
    %p28 = scmp.eq.s32.totalorder %s9, 0
    %p29 = por %p27, %p28
    %p30 = scmp.ne.s32.totalorder %s19, %s22
    %p31 = scmp.eq.s32.totalorder %s14, 1
    %p32 = por %p30, %p31
    %p33 = scmp.ne.s32.totalorder %s22, %s23
    %p34 = scmp.eq.s32.totalorder %s14, 0
    %p35 = por %p33, %p34
    %p36 = scmp.ne.s32.totalorder %s22, %s23
    %p37 = scmp.eq.s32.totalorder %s15, 1
    %p38 = por %p36, %p37
    %p40 = scmp.ne.s32.totalorder %s23, %s39
    %p41 = scmp.eq.s32.totalorder %s15, 0
    %p42 = por %p40, %p41
    %s44 = sadd.s32 %s43, 1
    %p47 = scmp.eq.s32.totalorder %s9, 1
    %p48 = scmp.ne.s32.totalorder %s43, %s45
    %p49 = scmp.eq.s32.totalorder %s9, 0
    %p50 = por %p48, %p49
    %p51 = scmp.ne.s32.totalorder %s43, %s45
    %p52 = scmp.eq.s32.totalorder %s14, 1
    %p53 = por %p51, %p52
    %p54 = scmp.ne.s32.totalorder %s45, %s46
    %p55 = scmp.eq.s32.totalorder %s14, 0
    %p56 = por %p54, %p55
    %p57 = scmp.ne.s32.totalorder %s45, %s46
    %p58 = scmp.eq.s32.totalorder %s15, 1
    %p59 = por %p57, %p58
    %p61 = scmp.ne.s32.totalorder %s46, %s60
    %p62 = scmp.eq.s32.totalorder %s15, 0
    %p63 = por %p61, %p62
    %s65 = sadd.s32 %s64, 1
    %p68 = scmp.eq.s32.totalorder %s9, 1
    %p69 = scmp.ne.s32.totalorder %s64, %s66
    %p70 = scmp.eq.s32.totalorder %s9, 0
    %p71 = por %p69, %p70
    %p72 = scmp.ne.s32.totalorder %s64, %s66
    %p73 = scmp.eq.s32.totalorder %s14, 1
    %p74 = por %p72, %p73
    %p75 = scmp.ne.s32.totalorder %s66, %s67
    %p76 = scmp.eq.s32.totalorder %s14, 0
    %p77 = por %p75, %p76
    %p78 = scmp.ne.s32.totalorder %s66, %s67
    %p79 = scmp.eq.s32.totalorder %s15, 1
    %p80 = por %p78, %p79
    %p82 = scmp.ne.s32.totalorder %s67, %s81
    %p83 = scmp.eq.s32.totalorder %s15, 0
    %p84 = por %p82, %p83
    %s85 = ssub.s32 %s9, %s16
    %p86 = scmp.eq.s32.totalorder %s85, 0
    %s88 = sadd.s32 %s87, 1
    %s89 = scalar_select %p86, %s87, %s88
    %p92 = pneg %p86
    %p93 = scmp.eq.s32.totalorder %s9, 1
    %p94 = por %p92, %p93
    %p95 = scmp.ne.s32.totalorder %s87, %s90
    %p96 = scmp.eq.s32.totalorder %s9, 0
    %p97 = por %p95, %p96
    %p98 = scmp.ne.s32.totalorder %s87, %s90
    %p99 = scmp.eq.s32.totalorder %s14, 1
    %p100 = por %p98, %p99
    %p101 = scmp.ne.s32.totalorder %s90, %s91
    %p102 = scmp.eq.s32.totalorder %s14, 0
    %p103 = por %p101, %p102
    %p104 = scmp.ne.s32.totalorder %s90, %s91
    %p105 = scmp.eq.s32.totalorder %s15, 1
    %p106 = por %p104, %p105
    %p108 = scmp.ne.s32.totalorder %s91, %s107
    %p109 = scmp.eq.s32.totalorder %s15, 0
    %p110 = por %p108, %p109
    %p111 = scmp.le.s32.totalorder 1, %s9
    %p112 = scmp.lt.s32.totalorder %s9, 3
    %p113 = pnand %p111, %p112
    %p114 = pneg %p113
    // Predicated region
    $region9: #{tpu_custom_call.1} parent=5 // pred_check
      _
    $region10: #{tpu_custom_call.1} parent=5 // pred_check_branch
      %116 = sbr.rel (%p113) target = $region12
    $region11: #{tpu_custom_call.1} parent=5 // pred_region
      %s117 = ssub.s32 %s9, 1
      // Predicated region
      $region13: #{tpu_custom_call.1} parent=11 // pred_check
        %p118 = pneg %p56
      $region14: #{tpu_custom_call.1} parent=11 // pred_check_branch
        %120 = sbr.rel (%p118) target = $region16
      $region15: #{tpu_custom_call.1} parent=11 // pred_region
        _
      $region16: #{tpu_custom_call.1} parent=11 // pred_fallthru
        _
      // Predicated region
      $region17: #{tpu_custom_call.1} parent=11 // pred_check
        %p121 = pneg %p77
      $region18: #{tpu_custom_call.1} parent=11 // pred_check_branch
        %123 = sbr.rel (%p121) target = $region20
      $region19: #{tpu_custom_call.1} parent=11 // pred_region
        _
      $region20: #{tpu_custom_call.1} parent=11 // pred_fallthru
        _
    $region12: #{tpu_custom_call.1} parent=5 // pred_fallthru
      _
    %p124 = scmp.lt.s32.totalorder %s9, 2
    // Predicated region
    $region21: #{tpu_custom_call.1} parent=5 // pred_check
      %p125 = pneg %p124
    $region22: #{tpu_custom_call.1} parent=5 // pred_check_branch
      %127 = sbr.rel (%p125) target = $region24
    $region23: #{tpu_custom_call.1} parent=5 // pred_region
      // Predicated region
      $region25: #{tpu_custom_call.1} parent=23 // pred_check
        %p128 = pneg %p29
      $region26: #{tpu_custom_call.1} parent=23 // pred_check_branch
        %130 = sbr.rel (%p128) target = $region28
      $region27: #{tpu_custom_call.1} parent=23 // pred_region
        %p131 = scmp.lt.s32.totalorder %s9, 1
        %s132 = scalar_select %p131, %s9, 1
        %s133 = smul.addr %s132, 442
        %s134 = smul.addr %s133, 8
        %s135 = scalar_lea.vmem %s0, %s134
      $region28: #{tpu_custom_call.1} parent=23 // pred_fallthru
        _
    $region24: #{tpu_custom_call.1} parent=5 // pred_fallthru
      _
    %p136 = scmp.le.s32.totalorder 1, %s9
    %p137 = scmp.lt.s32.totalorder %s9, 3
    %p138 = pnand %p136, %p137
    %p139 = pneg %p138
    // Predicated region
    $region29: #{tpu_custom_call.1} parent=5 // pred_check
      _
    $region30: #{tpu_custom_call.1} parent=5 // pred_check_branch
      %141 = sbr.rel (%p138) target = $region32
    $region31: #{tpu_custom_call.1} parent=5 // pred_region
      %s142 = ssub.s32 %s9, 1
      %p143 = scmp.lt.s32.totalorder %s14, 1
      %s144 = scalar_select %p143, %s14, 1
      %s145 = smul.addr %s144, 442
      %s146 = smul.addr %s145, 8
      %s147 = scalar_lea.vmem %s0, %s146
      %p148 = pneg %p35
      %p149 = pneg %p32
      %p150 = pneg %p56
      %p151 = pneg %p53
      %p152 = pneg %p77
      %p153 = pneg %p74
      %p154 = pneg %p103
      %p155 = pneg %p100
      %p156 = scmp.lt.s32.totalorder %s14, 1
      %s157 = scalar_select %p156, %s14, 1
      %s158 = smul.addr %s157, 112
      %s159 = smul.addr %s158, 8
      %s160 = scalar_lea.vmem %s3, %s159
      %p161 = scmp.lt.s32.totalorder %s14, 1
      %s162 = scalar_select %p161, %s14, 1
      %s163 = smul.addr %s162, 442
      %s164 = smul.addr %s163, 8
      %s165 = scalar_lea.vmem %s0, %s164
      %p166 = scmp.lt.s32.totalorder %s14, 1
      %s167 = scalar_select %p166, %s14, 1
      %s168 = smul.addr %s167, 112
      %s169 = smul.addr %s168, 8
      %s170 = scalar_lea.vmem %s3, %s169
      %v171 = vld [vmem:[%s2] sm:$0x1]
      %v172 = vlaneseq
      %v173 = vshrl.u32 %v172, 7
      %v174 = vadd.s32 %v173, 8
      %v175 = vadd.s32 %v173, 16
      %v176 = vadd.s32 %v173, 24
      %v177 = vadd.s32 %v173, 32
      %v178 = vadd.s32 %v173, 40
      %v179 = vadd.s32 %v173, 48
      %v180 = vlaneseq
      %v181 = vand.u32 %v180, 127
      %v182 = vmul.u32 %v173, 2
      %v183 = vmul.u32 %v174, 2
      %v184 = vmul.u32 %v175, 2
      %v185 = vmul.u32 %v176, 2
      %v186 = vmul.u32 %v177, 2
      %v187 = vmul.u32 %v178, 2
      %v188 = vmul.u32 %v179, 2
      %vm189 = vcmp.eq.s32.totalorder %v181, %v182
      %vm190 = vcmp.eq.s32.totalorder %v181, %v183
      %vm191 = vcmp.eq.s32.totalorder %v181, %v184
      %vm192 = vcmp.eq.s32.totalorder %v181, %v185
      %vm193 = vcmp.eq.s32.totalorder %v181, %v186
      %vm194 = vcmp.eq.s32.totalorder %v181, %v187
      %vm195 = vcmp.eq.s32.totalorder %v181, %v188
      %v196 = vsel %vm189, 1, 0
      %v197 = vsel %vm190, 1, 0
      %v198 = vsel %vm191, 1, 0
      %v199 = vsel %vm192, 1, 0
      %v200 = vsel %vm193, 1, 0
      %v201 = vsel %vm194, 1, 0
      %v202 = vsel %vm195, 1, 0
      %v203 = vcvt.s32.f32 %v196
      %v204 = vcvt.s32.f32 %v197
      %v205 = vcvt.s32.f32 %v198
      %v206 = vcvt.s32.f32 %v199
      %v207 = vcvt.s32.f32 %v200
      %v208 = vcvt.s32.f32 %v201
      %v209 = vcvt.s32.f32 %v202
      %v210 = vadd.s32 %v182, 1
      %v211 = vadd.s32 %v183, 1
      %v212 = vadd.s32 %v184, 1
      %v213 = vadd.s32 %v185, 1
      %v214 = vadd.s32 %v186, 1
      %v215 = vadd.s32 %v187, 1
      %v216 = vadd.s32 %v188, 1
      %vm217 = vcmp.eq.s32.totalorder %v181, %v210
      %vm218 = vcmp.eq.s32.totalorder %v181, %v211
      %vm219 = vcmp.eq.s32.totalorder %v181, %v212
      %vm220 = vcmp.eq.s32.totalorder %v181, %v213
      %vm221 = vcmp.eq.s32.totalorder %v181, %v214
      %vm222 = vcmp.eq.s32.totalorder %v181, %v215
      %vm223 = vcmp.eq.s32.totalorder %v181, %v216
      %v224 = vsel %vm217, 1, 0
      %v225 = vsel %vm218, 1, 0
      %v226 = vsel %vm219, 1, 0
      %v227 = vsel %vm220, 1, 0
      %v228 = vsel %vm221, 1, 0
      %v229 = vsel %vm222, 1, 0
      %v230 = vsel %vm223, 1, 0
      %v231 = vcvt.s32.f32 %v224
      %v232 = vcvt.s32.f32 %v225
      %v233 = vcvt.s32.f32 %v226
      %v234 = vcvt.s32.f32 %v227
      %v235 = vcvt.s32.f32 %v228
      %v236 = vcvt.s32.f32 %v229
      %v237 = vcvt.s32.f32 %v230
      loop: start=0, step=1, limit=16
      $region33: #{tpu_custom_call.1} parent=31 // loop_pre_header
        _
      $region34: #{tpu_custom_call.1} parent=31 // loop_header
        %s239 = sphi 0, %s243
        %p240 = scmp.ge.s32.totalorder %s239, 16
      $region35: #{tpu_custom_call.1} parent=31 // loop_header_branch
        %242 = sbr.rel (%p240) target = $region39
      $region36: #{tpu_custom_call.1} parent=31 // loop_body
        %s244 = smul.u32 %s239, 2
        %s245 = smul.u32 %s244, 104
        %s246 = scalar_lea.vmem %s165, %s245
        %v247 = vld [vmem:[%s246] sm:$0xff]
        %v248 = vld [vmem:[%s246 + $0x8] sm:$0xff]
        %v249 = vld [vmem:[%s246 + $0x10] sm:$0xff]
        %v250 = vld [vmem:[%s246 + $0x18] sm:$0xff]
        %v251 = vld [vmem:[%s246 + $0x20] sm:$0xff]
        %v252 = vld [vmem:[%s246 + $0x28] sm:$0xff]
        %v253 = vld [vmem:[%s246 + $0x30] sm:$0xff]
        %v254 = vld [vmem:[%s246 + $0x38] sm:$0xff]
        %v255 = vld [vmem:[%s246 + $0x40] sm:$0xff]
        %v256 = vld [vmem:[%s246 + $0x48] sm:$0xff]
        %v257 = vld [vmem:[%s246 + $0x50] sm:$0xff]
        %v258 = vld [vmem:[%s246 + $0x58] sm:$0xff]
        %v259 = vld [vmem:[%s246 + $0x60] sm:$0x3f]
        %v260 = vld [vmem:[%s1] sm:$0x1]
        %262 = vset.pattern.permute.xlu0 0
        %263 = vperm.xlu0 %262, %v247
        %v264 = vpop.permute.xlu0 %263
        %267 = vset.pattern.permute.xlu0 0
        %268 = vperm.xlu0 %267, %v248
        %v269 = vpop.permute.xlu0 %268
        %272 = vset.pattern.permute.xlu0 0
        %273 = vperm.xlu0 %272, %v249
        %v274 = vpop.permute.xlu0 %273
        %277 = vset.pattern.permute.xlu0 0
        %278 = vperm.xlu0 %277, %v250
        %v279 = vpop.permute.xlu0 %278
        %282 = vset.pattern.permute.xlu0 0
        %283 = vperm.xlu0 %282, %v251
        %v284 = vpop.permute.xlu0 %283
        %287 = vset.pattern.permute.xlu0 0
        %288 = vperm.xlu0 %287, %v252
        %v289 = vpop.permute.xlu0 %288
        %292 = vset.pattern.permute.xlu0 0
        %293 = vperm.xlu0 %292, %v253
        %v294 = vpop.permute.xlu0 %293
        %297 = vset.pattern.permute.xlu0 0
        %298 = vperm.xlu0 %297, %v254
        %v299 = vpop.permute.xlu0 %298
        %302 = vset.pattern.permute.xlu0 0
        %303 = vperm.xlu0 %302, %v255
        %v304 = vpop.permute.xlu0 %303
        %307 = vset.pattern.permute.xlu0 0
        %308 = vperm.xlu0 %307, %v256
        %v309 = vpop.permute.xlu0 %308
        %312 = vset.pattern.permute.xlu0 0
        %313 = vperm.xlu0 %312, %v257
        %v314 = vpop.permute.xlu0 %313
        %317 = vset.pattern.permute.xlu0 0
        %318 = vperm.xlu0 %317, %v258
        %v319 = vpop.permute.xlu0 %318
        %322 = vset.pattern.permute.xlu0 0
        %323 = vperm.xlu0 %322, %v259
        %v324 = vpop.permute.xlu0 %323
        %v327 = vperm.slane %v260, 0
        %v329 = vmul.f32 %v264, %v327
        %v330 = vmul.f32 %v269, %v327
        %v331 = vmul.f32 %v274, %v327
        %v332 = vmul.f32 %v279, %v327
        %v333 = vmul.f32 %v284, %v327
        %v334 = vmul.f32 %v289, %v327
        %v335 = vmul.f32 %v294, %v327
        %v336 = vmul.f32 %v299, %v327
        %v337 = vmul.f32 %v304, %v327
        %v338 = vmul.f32 %v309, %v327
        %v339 = vmul.f32 %v314, %v327
        %v340 = vmul.f32 %v319, %v327
        %v341 = vmul.f32 %v324, %v327
        %v342 = vadd.f32 %v329, 0.0
        %v343 = vadd.f32 %v330, 0.0
        %v344 = vadd.f32 %v331, 0.0
        %v345 = vadd.f32 %v332, 0.0
        %v346 = vadd.f32 %v333, 0.0
        %v347 = vadd.f32 %v334, 0.0
        %v348 = vadd.f32 %v335, 0.0
        %v349 = vadd.f32 %v336, 0.0
        %v350 = vadd.f32 %v337, 0.0
        %v351 = vadd.f32 %v338, 0.0
        %v352 = vadd.f32 %v339, 0.0
        %v353 = vadd.f32 %v340, 0.0
        %v354 = vadd.f32 %v341, 0.0
        %s355 = scalar_lea.vmem %s1, 1
        %v356 = vld [vmem:[%s355] sm:$0x1]
        %v358 = vperm.slane %v356, 0
        %v360 = vmul.f32 %v264, %v358
        %v361 = vmul.f32 %v269, %v358
        %v362 = vmul.f32 %v274, %v358
        %v363 = vmul.f32 %v279, %v358
        %v364 = vmul.f32 %v284, %v358
        %v365 = vmul.f32 %v289, %v358
        %v366 = vmul.f32 %v294, %v358
        %v367 = vmul.f32 %v299, %v358
        %v368 = vmul.f32 %v304, %v358
        %v369 = vmul.f32 %v309, %v358
        %v370 = vmul.f32 %v314, %v358
        %v371 = vmul.f32 %v319, %v358
        %v372 = vmul.f32 %v324, %v358
        %vm386 = vcmask 1046528
        %v387 = vrot.slane %v360, 1
        %v388 = vrot.slane %v361, 1
        %v389 = vsel %vm386, %v387, %v388
        %v390 = vrot.slane %v362, 1
        %v391 = vsel %vm386, %v388, %v390
        %v392 = vrot.slane %v363, 1
        %v393 = vsel %vm386, %v390, %v392
        %v394 = vrot.slane %v364, 1
        %v395 = vsel %vm386, %v392, %v394
        %v396 = vrot.slane %v365, 1
        %v397 = vsel %vm386, %v394, %v396
        %v398 = vrot.slane %v366, 1
        %v399 = vsel %vm386, %v396, %v398
        %v400 = vrot.slane %v367, 1
        %v401 = vsel %vm386, %v398, %v400
        %v402 = vrot.slane %v368, 1
        %v403 = vsel %vm386, %v400, %v402
        %v404 = vrot.slane %v369, 1
        %v405 = vsel %vm386, %v402, %v404
        %v406 = vrot.slane %v370, 1
        %v407 = vsel %vm386, %v404, %v406
        %v408 = vrot.slane %v371, 1
        %v409 = vsel %vm386, %v406, %v408
        %v410 = vrot.slane %v372, 1
        %v411 = vsel %vm386, %v408, %v410
        %v425 = vadd.f32 %v342, %v389
        %v426 = vadd.f32 %v343, %v391
        %v427 = vadd.f32 %v344, %v393
        %v428 = vadd.f32 %v345, %v395
        %v429 = vadd.f32 %v346, %v397
        %v430 = vadd.f32 %v347, %v399
        %v431 = vadd.f32 %v348, %v401
        %v432 = vadd.f32 %v349, %v403
        %v433 = vadd.f32 %v350, %v405
        %v434 = vadd.f32 %v351, %v407
        %v435 = vadd.f32 %v352, %v409
        %v436 = vadd.f32 %v353, %v411
        %v437 = vadd.f32 %v354, %v410
        %s438 = scalar_lea.vmem %s1, 2
        %v439 = vld [vmem:[%s438] sm:$0x1]
        %v441 = vperm.slane %v439, 0
        %v443 = vmul.f32 %v264, %v441
        %v444 = vmul.f32 %v269, %v441
        %v445 = vmul.f32 %v274, %v441
        %v446 = vmul.f32 %v279, %v441
        %v447 = vmul.f32 %v284, %v441
        %v448 = vmul.f32 %v289, %v441
        %v449 = vmul.f32 %v294, %v441
        %v450 = vmul.f32 %v299, %v441
        %v451 = vmul.f32 %v304, %v441
        %v452 = vmul.f32 %v309, %v441
        %v453 = vmul.f32 %v314, %v441
        %v454 = vmul.f32 %v319, %v441
        %v455 = vmul.f32 %v324, %v441
        %vm469 = vcmask 1045504
        %v470 = vrot.slane %v443, 2
        %v471 = vrot.slane %v444, 2
        %v472 = vsel %vm469, %v470, %v471
        %v473 = vrot.slane %v445, 2
        %v474 = vsel %vm469, %v471, %v473
        %v475 = vrot.slane %v446, 2
        %v476 = vsel %vm469, %v473, %v475
        %v477 = vrot.slane %v447, 2
        %v478 = vsel %vm469, %v475, %v477
        %v479 = vrot.slane %v448, 2
        %v480 = vsel %vm469, %v477, %v479
        %v481 = vrot.slane %v449, 2
        %v482 = vsel %vm469, %v479, %v481
        %v483 = vrot.slane %v450, 2
        %v484 = vsel %vm469, %v481, %v483
        %v485 = vrot.slane %v451, 2
        %v486 = vsel %vm469, %v483, %v485
        %v487 = vrot.slane %v452, 2
        %v488 = vsel %vm469, %v485, %v487
        %v489 = vrot.slane %v453, 2
        %v490 = vsel %vm469, %v487, %v489
        %v491 = vrot.slane %v454, 2
        %v492 = vsel %vm469, %v489, %v491
        %v493 = vrot.slane %v455, 2
        %v494 = vsel %vm469, %v491, %v493
        %v508 = vadd.f32 %v425, %v472
        %v509 = vadd.f32 %v426, %v474
        %v510 = vadd.f32 %v427, %v476
        %v511 = vadd.f32 %v428, %v478
        %v512 = vadd.f32 %v429, %v480
        %v513 = vadd.f32 %v430, %v482
        %v514 = vadd.f32 %v431, %v484
        %v515 = vadd.f32 %v432, %v486
        %v516 = vadd.f32 %v433, %v488
        %v517 = vadd.f32 %v434, %v490
        %v518 = vadd.f32 %v435, %v492
        %v519 = vadd.f32 %v436, %v494
        %v520 = vadd.f32 %v437, %v493
        %s521 = sadd.s32 %s244, 1
        %s522 = smul.u32 %s521, 104
        %s523 = scalar_lea.vmem %s165, %s522
        %v524 = vld [vmem:[%s523] sm:$0xff]
        %v525 = vld [vmem:[%s523 + $0x8] sm:$0xff]
        %v526 = vld [vmem:[%s523 + $0x10] sm:$0xff]
        %v527 = vld [vmem:[%s523 + $0x18] sm:$0xff]
        %v528 = vld [vmem:[%s523 + $0x20] sm:$0xff]
        %v529 = vld [vmem:[%s523 + $0x28] sm:$0xff]
        %v530 = vld [vmem:[%s523 + $0x30] sm:$0xff]
        %v531 = vld [vmem:[%s523 + $0x38] sm:$0xff]
        %v532 = vld [vmem:[%s523 + $0x40] sm:$0xff]
        %v533 = vld [vmem:[%s523 + $0x48] sm:$0xff]
        %v534 = vld [vmem:[%s523 + $0x50] sm:$0xff]
        %v535 = vld [vmem:[%s523 + $0x58] sm:$0xff]
        %v536 = vld [vmem:[%s523 + $0x60] sm:$0x3f]
        %s537 = scalar_lea.vmem %s1, 3
        %v538 = vld [vmem:[%s537] sm:$0x1]
        %540 = vset.pattern.permute.xlu0 0
        %541 = vperm.xlu0 %540, %v524
        %v542 = vpop.permute.xlu0 %541
        %545 = vset.pattern.permute.xlu0 0
        %546 = vperm.xlu0 %545, %v525
        %v547 = vpop.permute.xlu0 %546
        %550 = vset.pattern.permute.xlu0 0
        %551 = vperm.xlu0 %550, %v526
        %v552 = vpop.permute.xlu0 %551
        %555 = vset.pattern.permute.xlu0 0
        %556 = vperm.xlu0 %555, %v527
        %v557 = vpop.permute.xlu0 %556
        %560 = vset.pattern.permute.xlu0 0
        %561 = vperm.xlu0 %560, %v528
        %v562 = vpop.permute.xlu0 %561
        %565 = vset.pattern.permute.xlu0 0
        %566 = vperm.xlu0 %565, %v529
        %v567 = vpop.permute.xlu0 %566
        %570 = vset.pattern.permute.xlu0 0
        %571 = vperm.xlu0 %570, %v530
        %v572 = vpop.permute.xlu0 %571
        %575 = vset.pattern.permute.xlu0 0
        %576 = vperm.xlu0 %575, %v531
        %v577 = vpop.permute.xlu0 %576
        %580 = vset.pattern.permute.xlu0 0
        %581 = vperm.xlu0 %580, %v532
        %v582 = vpop.permute.xlu0 %581
        %585 = vset.pattern.permute.xlu0 0
        %586 = vperm.xlu0 %585, %v533
        %v587 = vpop.permute.xlu0 %586
        %590 = vset.pattern.permute.xlu0 0
        %591 = vperm.xlu0 %590, %v534
        %v592 = vpop.permute.xlu0 %591
        %595 = vset.pattern.permute.xlu0 0
        %596 = vperm.xlu0 %595, %v535
        %v597 = vpop.permute.xlu0 %596
        %600 = vset.pattern.permute.xlu0 0
        %601 = vperm.xlu0 %600, %v536
        %v602 = vpop.permute.xlu0 %601
        %v605 = vperm.slane %v538, 0
        %v607 = vmul.f32 %v542, %v605
        %v608 = vmul.f32 %v547, %v605
        %v609 = vmul.f32 %v552, %v605
        %v610 = vmul.f32 %v557, %v605
        %v611 = vmul.f32 %v562, %v605
        %v612 = vmul.f32 %v567, %v605
        %v613 = vmul.f32 %v572, %v605
        %v614 = vmul.f32 %v577, %v605
        %v615 = vmul.f32 %v582, %v605
        %v616 = vmul.f32 %v587, %v605
        %v617 = vmul.f32 %v592, %v605
        %v618 = vmul.f32 %v597, %v605
        %v619 = vmul.f32 %v602, %v605
        %v620 = vadd.f32 %v508, %v607
        %v621 = vadd.f32 %v509, %v608
        %v622 = vadd.f32 %v510, %v609
        %v623 = vadd.f32 %v511, %v610
        %v624 = vadd.f32 %v512, %v611
        %v625 = vadd.f32 %v513, %v612
        %v626 = vadd.f32 %v514, %v613
        %v627 = vadd.f32 %v515, %v614
        %v628 = vadd.f32 %v516, %v615
        %v629 = vadd.f32 %v517, %v616
        %v630 = vadd.f32 %v518, %v617
        %v631 = vadd.f32 %v519, %v618
        %v632 = vadd.f32 %v520, %v619
        %s633 = scalar_lea.vmem %s1, 4
        %v634 = vld [vmem:[%s633] sm:$0x1]
        %v636 = vperm.slane %v634, 0
        %v638 = vmul.f32 %v542, %v636
        %v639 = vmul.f32 %v547, %v636
        %v640 = vmul.f32 %v552, %v636
        %v641 = vmul.f32 %v557, %v636
        %v642 = vmul.f32 %v562, %v636
        %v643 = vmul.f32 %v567, %v636
        %v644 = vmul.f32 %v572, %v636
        %v645 = vmul.f32 %v577, %v636
        %v646 = vmul.f32 %v582, %v636
        %v647 = vmul.f32 %v587, %v636
        %v648 = vmul.f32 %v592, %v636
        %v649 = vmul.f32 %v597, %v636
        %v650 = vmul.f32 %v602, %v636
        %v664 = vrot.slane %v638, 1
        %v665 = vrot.slane %v639, 1
        %v666 = vsel %vm386, %v664, %v665
        %v667 = vrot.slane %v640, 1
        %v668 = vsel %vm386, %v665, %v667
        %v669 = vrot.slane %v641, 1
        %v670 = vsel %vm386, %v667, %v669
        %v671 = vrot.slane %v642, 1
        %v672 = vsel %vm386, %v669, %v671
        %v673 = vrot.slane %v643, 1
        %v674 = vsel %vm386, %v671, %v673
        %v675 = vrot.slane %v644, 1
        %v676 = vsel %vm386, %v673, %v675
        %v677 = vrot.slane %v645, 1
        %v678 = vsel %vm386, %v675, %v677
        %v679 = vrot.slane %v646, 1
        %v680 = vsel %vm386, %v677, %v679
        %v681 = vrot.slane %v647, 1
        %v682 = vsel %vm386, %v679, %v681
        %v683 = vrot.slane %v648, 1
        %v684 = vsel %vm386, %v681, %v683
        %v685 = vrot.slane %v649, 1
        %v686 = vsel %vm386, %v683, %v685
        %v687 = vrot.slane %v650, 1
        %v688 = vsel %vm386, %v685, %v687
        %v702 = vadd.f32 %v620, %v666
        %v703 = vadd.f32 %v621, %v668
        %v704 = vadd.f32 %v622, %v670
        %v705 = vadd.f32 %v623, %v672
        %v706 = vadd.f32 %v624, %v674
        %v707 = vadd.f32 %v625, %v676
        %v708 = vadd.f32 %v626, %v678
        %v709 = vadd.f32 %v627, %v680
        %v710 = vadd.f32 %v628, %v682
        %v711 = vadd.f32 %v629, %v684
        %v712 = vadd.f32 %v630, %v686
        %v713 = vadd.f32 %v631, %v688
        %v714 = vadd.f32 %v632, %v687
        %s715 = scalar_lea.vmem %s1, 5
        %v716 = vld [vmem:[%s715] sm:$0x1]
        %v718 = vperm.slane %v716, 0
        %v720 = vmul.f32 %v542, %v718
        %v721 = vmul.f32 %v547, %v718
        %v722 = vmul.f32 %v552, %v718
        %v723 = vmul.f32 %v557, %v718
        %v724 = vmul.f32 %v562, %v718
        %v725 = vmul.f32 %v567, %v718
        %v726 = vmul.f32 %v572, %v718
        %v727 = vmul.f32 %v577, %v718
        %v728 = vmul.f32 %v582, %v718
        %v729 = vmul.f32 %v587, %v718
        %v730 = vmul.f32 %v592, %v718
        %v731 = vmul.f32 %v597, %v718
        %v732 = vmul.f32 %v602, %v718
        %v746 = vrot.slane %v720, 2
        %v747 = vrot.slane %v721, 2
        %v748 = vsel %vm469, %v746, %v747
        %v749 = vrot.slane %v722, 2
        %v750 = vsel %vm469, %v747, %v749
        %v751 = vrot.slane %v723, 2
        %v752 = vsel %vm469, %v749, %v751
        %v753 = vrot.slane %v724, 2
        %v754 = vsel %vm469, %v751, %v753
        %v755 = vrot.slane %v725, 2
        %v756 = vsel %vm469, %v753, %v755
        %v757 = vrot.slane %v726, 2
        %v758 = vsel %vm469, %v755, %v757
        %v759 = vrot.slane %v727, 2
        %v760 = vsel %vm469, %v757, %v759
        %v761 = vrot.slane %v728, 2
        %v762 = vsel %vm469, %v759, %v761
        %v763 = vrot.slane %v729, 2
        %v764 = vsel %vm469, %v761, %v763
        %v765 = vrot.slane %v730, 2
        %v766 = vsel %vm469, %v763, %v765
        %v767 = vrot.slane %v731, 2
        %v768 = vsel %vm469, %v765, %v767
        %v769 = vrot.slane %v732, 2
        %v770 = vsel %vm469, %v767, %v769
        %v784 = vadd.f32 %v702, %v748
        %v785 = vadd.f32 %v703, %v750
        %v786 = vadd.f32 %v704, %v752
        %v787 = vadd.f32 %v705, %v754
        %v788 = vadd.f32 %v706, %v756
        %v789 = vadd.f32 %v707, %v758
        %v790 = vadd.f32 %v708, %v760
        %v791 = vadd.f32 %v709, %v762
        %v792 = vadd.f32 %v710, %v764
        %v793 = vadd.f32 %v711, %v766
        %v794 = vadd.f32 %v712, %v768
        %v795 = vadd.f32 %v713, %v770
        %v796 = vadd.f32 %v714, %v769
        %s797 = sadd.s32 %s244, 2
        %s798 = smul.u32 %s797, 104
        %s799 = scalar_lea.vmem %s165, %s798
        %v800 = vld [vmem:[%s799] sm:$0xff]
        %v801 = vld [vmem:[%s799 + $0x8] sm:$0xff]
        %v802 = vld [vmem:[%s799 + $0x10] sm:$0xff]
        %v803 = vld [vmem:[%s799 + $0x18] sm:$0xff]
        %v804 = vld [vmem:[%s799 + $0x20] sm:$0xff]
        %v805 = vld [vmem:[%s799 + $0x28] sm:$0xff]
        %v806 = vld [vmem:[%s799 + $0x30] sm:$0xff]
        %v807 = vld [vmem:[%s799 + $0x38] sm:$0xff]
        %v808 = vld [vmem:[%s799 + $0x40] sm:$0xff]
        %v809 = vld [vmem:[%s799 + $0x48] sm:$0xff]
        %v810 = vld [vmem:[%s799 + $0x50] sm:$0xff]
        %v811 = vld [vmem:[%s799 + $0x58] sm:$0xff]
        %v812 = vld [vmem:[%s799 + $0x60] sm:$0x3f]
        %s813 = scalar_lea.vmem %s1, 6
        %v814 = vld [vmem:[%s813] sm:$0x1]
        %816 = vset.pattern.permute.xlu0 0
        %817 = vperm.xlu0 %816, %v800
        %v818 = vpop.permute.xlu0 %817
        %821 = vset.pattern.permute.xlu0 0
        %822 = vperm.xlu0 %821, %v801
        %v823 = vpop.permute.xlu0 %822
        %826 = vset.pattern.permute.xlu0 0
        %827 = vperm.xlu0 %826, %v802
        %v828 = vpop.permute.xlu0 %827
        %831 = vset.pattern.permute.xlu0 0
        %832 = vperm.xlu0 %831, %v803
        %v833 = vpop.permute.xlu0 %832
        %836 = vset.pattern.permute.xlu0 0
        %837 = vperm.xlu0 %836, %v804
        %v838 = vpop.permute.xlu0 %837
        %841 = vset.pattern.permute.xlu0 0
        %842 = vperm.xlu0 %841, %v805
        %v843 = vpop.permute.xlu0 %842
        %846 = vset.pattern.permute.xlu0 0
        %847 = vperm.xlu0 %846, %v806
        %v848 = vpop.permute.xlu0 %847
        %851 = vset.pattern.permute.xlu0 0
        %852 = vperm.xlu0 %851, %v807
        %v853 = vpop.permute.xlu0 %852
        %856 = vset.pattern.permute.xlu0 0
        %857 = vperm.xlu0 %856, %v808
        %v858 = vpop.permute.xlu0 %857
        %861 = vset.pattern.permute.xlu0 0
        %862 = vperm.xlu0 %861, %v809
        %v863 = vpop.permute.xlu0 %862
        %866 = vset.pattern.permute.xlu0 0
        %867 = vperm.xlu0 %866, %v810
        %v868 = vpop.permute.xlu0 %867
        %871 = vset.pattern.permute.xlu0 0
        %872 = vperm.xlu0 %871, %v811
        %v873 = vpop.permute.xlu0 %872
        %876 = vset.pattern.permute.xlu0 0
        %877 = vperm.xlu0 %876, %v812
        %v878 = vpop.permute.xlu0 %877
        %v881 = vperm.slane %v814, 0
        %v883 = vmul.f32 %v818, %v881
        %v884 = vmul.f32 %v823, %v881
        %v885 = vmul.f32 %v828, %v881
        %v886 = vmul.f32 %v833, %v881
        %v887 = vmul.f32 %v838, %v881
        %v888 = vmul.f32 %v843, %v881
        %v889 = vmul.f32 %v848, %v881
        %v890 = vmul.f32 %v853, %v881
        %v891 = vmul.f32 %v858, %v881
        %v892 = vmul.f32 %v863, %v881
        %v893 = vmul.f32 %v868, %v881
        %v894 = vmul.f32 %v873, %v881
        %v895 = vmul.f32 %v878, %v881
        %v896 = vadd.f32 %v784, %v883
        %v897 = vadd.f32 %v785, %v884
        %v898 = vadd.f32 %v786, %v885
        %v899 = vadd.f32 %v787, %v886
        %v900 = vadd.f32 %v788, %v887
        %v901 = vadd.f32 %v789, %v888
        %v902 = vadd.f32 %v790, %v889
        %v903 = vadd.f32 %v791, %v890
        %v904 = vadd.f32 %v792, %v891
        %v905 = vadd.f32 %v793, %v892
        %v906 = vadd.f32 %v794, %v893
        %v907 = vadd.f32 %v795, %v894
        %v908 = vadd.f32 %v796, %v895
        %s909 = scalar_lea.vmem %s1, 7
        %v910 = vld [vmem:[%s909] sm:$0x1]
        %v912 = vperm.slane %v910, 0
        %v914 = vmul.f32 %v818, %v912
        %v915 = vmul.f32 %v823, %v912
        %v916 = vmul.f32 %v828, %v912
        %v917 = vmul.f32 %v833, %v912
        %v918 = vmul.f32 %v838, %v912
        %v919 = vmul.f32 %v843, %v912
        %v920 = vmul.f32 %v848, %v912
        %v921 = vmul.f32 %v853, %v912
        %v922 = vmul.f32 %v858, %v912
        %v923 = vmul.f32 %v863, %v912
        %v924 = vmul.f32 %v868, %v912
        %v925 = vmul.f32 %v873, %v912
        %v926 = vmul.f32 %v878, %v912
        %v940 = vrot.slane %v914, 1
        %v941 = vrot.slane %v915, 1
        %v942 = vsel %vm386, %v940, %v941
        %v943 = vrot.slane %v916, 1
        %v944 = vsel %vm386, %v941, %v943
        %v945 = vrot.slane %v917, 1
        %v946 = vsel %vm386, %v943, %v945
        %v947 = vrot.slane %v918, 1
        %v948 = vsel %vm386, %v945, %v947
        %v949 = vrot.slane %v919, 1
        %v950 = vsel %vm386, %v947, %v949
        %v951 = vrot.slane %v920, 1
        %v952 = vsel %vm386, %v949, %v951
        %v953 = vrot.slane %v921, 1
        %v954 = vsel %vm386, %v951, %v953
        %v955 = vrot.slane %v922, 1
        %v956 = vsel %vm386, %v953, %v955
        %v957 = vrot.slane %v923, 1
        %v958 = vsel %vm386, %v955, %v957
        %v959 = vrot.slane %v924, 1
        %v960 = vsel %vm386, %v957, %v959
        %v961 = vrot.slane %v925, 1
        %v962 = vsel %vm386, %v959, %v961
        %v963 = vrot.slane %v926, 1
        %v964 = vsel %vm386, %v961, %v963
        %v978 = vadd.f32 %v896, %v942
        %v979 = vadd.f32 %v897, %v944
        %v980 = vadd.f32 %v898, %v946
        %v981 = vadd.f32 %v899, %v948
        %v982 = vadd.f32 %v900, %v950
        %v983 = vadd.f32 %v901, %v952
        %v984 = vadd.f32 %v902, %v954
        %v985 = vadd.f32 %v903, %v956
        %v986 = vadd.f32 %v904, %v958
        %v987 = vadd.f32 %v905, %v960
        %v988 = vadd.f32 %v906, %v962
        %v989 = vadd.f32 %v907, %v964
        %v990 = vadd.f32 %v908, %v963
        %s991 = scalar_lea.vmem %s1, 8
        %v992 = vld [vmem:[%s991] sm:$0x1]
        %v994 = vperm.slane %v992, 0
        %v996 = vmul.f32 %v818, %v994
        %v997 = vmul.f32 %v823, %v994
        %v998 = vmul.f32 %v828, %v994
        %v999 = vmul.f32 %v833, %v994
        %v1000 = vmul.f32 %v838, %v994
        %v1001 = vmul.f32 %v843, %v994
        %v1002 = vmul.f32 %v848, %v994
        %v1003 = vmul.f32 %v853, %v994
        %v1004 = vmul.f32 %v858, %v994
        %v1005 = vmul.f32 %v863, %v994
        %v1006 = vmul.f32 %v868, %v994
        %v1007 = vmul.f32 %v873, %v994
        %v1008 = vmul.f32 %v878, %v994
        %v1022 = vrot.slane %v996, 2
        %v1023 = vrot.slane %v997, 2
        %v1024 = vsel %vm469, %v1022, %v1023
        %v1025 = vrot.slane %v998, 2
        %v1026 = vsel %vm469, %v1023, %v1025
        %v1027 = vrot.slane %v999, 2
        %v1028 = vsel %vm469, %v1025, %v1027
        %v1029 = vrot.slane %v1000, 2
        %v1030 = vsel %vm469, %v1027, %v1029
        %v1031 = vrot.slane %v1001, 2
        %v1032 = vsel %vm469, %v1029, %v1031
        %v1033 = vrot.slane %v1002, 2
        %v1034 = vsel %vm469, %v1031, %v1033
        %v1035 = vrot.slane %v1003, 2
        %v1036 = vsel %vm469, %v1033, %v1035
        %v1037 = vrot.slane %v1004, 2
        %v1038 = vsel %vm469, %v1035, %v1037
        %v1039 = vrot.slane %v1005, 2
        %v1040 = vsel %vm469, %v1037, %v1039
        %v1041 = vrot.slane %v1006, 2
        %v1042 = vsel %vm469, %v1039, %v1041
        %v1043 = vrot.slane %v1007, 2
        %v1044 = vsel %vm469, %v1041, %v1043
        %v1045 = vrot.slane %v1008, 2
        %v1046 = vsel %vm469, %v1043, %v1045
        %v1060 = vadd.f32 %v978, %v1024
        %v1061 = vadd.f32 %v979, %v1026
        %v1062 = vadd.f32 %v980, %v1028
        %v1063 = vadd.f32 %v981, %v1030
        %v1064 = vadd.f32 %v982, %v1032
        %v1065 = vadd.f32 %v983, %v1034
        %v1066 = vadd.f32 %v984, %v1036
        %v1067 = vadd.f32 %v985, %v1038
        %v1068 = vadd.f32 %v986, %v1040
        %v1069 = vadd.f32 %v987, %v1042
        %v1070 = vadd.f32 %v988, %v1044
        %v1071 = vadd.f32 %v989, %v1046
        %v1072 = vadd.f32 %v990, %v1045
        %v1074 = vperm.slane %v171, 0
        %v1076 = vadd.f32 %v1060, %v1074
        %v1077 = vadd.f32 %v1061, %v1074
        %v1078 = vadd.f32 %v1062, %v1074
        %v1079 = vadd.f32 %v1063, %v1074
        %v1080 = vadd.f32 %v1064, %v1074
        %v1081 = vadd.f32 %v1065, %v1074
        %v1082 = vadd.f32 %v1066, %v1074
        %v1083 = vadd.f32 %v1067, %v1074
        %v1084 = vadd.f32 %v1068, %v1074
        %v1085 = vadd.f32 %v1069, %v1074
        %v1086 = vadd.f32 %v1070, %v1074
        %v1087 = vadd.f32 %v1071, %v1074
        %v1088 = vadd.f32 %v1072, %v1074
        %v1089 = vmax.f32 %v1076, 0.0
        %v1090 = vmax.f32 %v1077, 0.0
        %v1091 = vmax.f32 %v1078, 0.0
        %v1092 = vmax.f32 %v1079, 0.0
        %v1093 = vmax.f32 %v1080, 0.0
        %v1094 = vmax.f32 %v1081, 0.0
        %v1095 = vmax.f32 %v1082, 0.0
        %v1096 = vmax.f32 %v1083, 0.0
        %v1097 = vmax.f32 %v1084, 0.0
        %v1098 = vmax.f32 %v1085, 0.0
        %v1099 = vmax.f32 %v1086, 0.0
        %v1100 = vmax.f32 %v1087, 0.0
        %v1101 = vmax.f32 %v1088, 0.0
        %v1102 = vmul.f32 %v542, %v327
        %v1103 = vmul.f32 %v547, %v327
        %v1104 = vmul.f32 %v552, %v327
        %v1105 = vmul.f32 %v557, %v327
        %v1106 = vmul.f32 %v562, %v327
        %v1107 = vmul.f32 %v567, %v327
        %v1108 = vmul.f32 %v572, %v327
        %v1109 = vmul.f32 %v577, %v327
        %v1110 = vmul.f32 %v582, %v327
        %v1111 = vmul.f32 %v587, %v327
        %v1112 = vmul.f32 %v592, %v327
        %v1113 = vmul.f32 %v597, %v327
        %v1114 = vmul.f32 %v602, %v327
        %v1115 = vadd.f32 %v1102, 0.0
        %v1116 = vadd.f32 %v1103, 0.0
        %v1117 = vadd.f32 %v1104, 0.0
        %v1118 = vadd.f32 %v1105, 0.0
        %v1119 = vadd.f32 %v1106, 0.0
        %v1120 = vadd.f32 %v1107, 0.0
        %v1121 = vadd.f32 %v1108, 0.0
        %v1122 = vadd.f32 %v1109, 0.0
        %v1123 = vadd.f32 %v1110, 0.0
        %v1124 = vadd.f32 %v1111, 0.0
        %v1125 = vadd.f32 %v1112, 0.0
        %v1126 = vadd.f32 %v1113, 0.0
        %v1127 = vadd.f32 %v1114, 0.0
        %v1128 = vmul.f32 %v542, %v358
        %v1129 = vmul.f32 %v547, %v358
        %v1130 = vmul.f32 %v552, %v358
        %v1131 = vmul.f32 %v557, %v358
        %v1132 = vmul.f32 %v562, %v358
        %v1133 = vmul.f32 %v567, %v358
        %v1134 = vmul.f32 %v572, %v358
        %v1135 = vmul.f32 %v577, %v358
        %v1136 = vmul.f32 %v582, %v358
        %v1137 = vmul.f32 %v587, %v358
        %v1138 = vmul.f32 %v592, %v358
        %v1139 = vmul.f32 %v597, %v358
        %v1140 = vmul.f32 %v602, %v358
        %v1154 = vrot.slane %v1128, 1
        %v1155 = vrot.slane %v1129, 1
        %v1156 = vsel %vm386, %v1154, %v1155
        %v1157 = vrot.slane %v1130, 1
        %v1158 = vsel %vm386, %v1155, %v1157
        %v1159 = vrot.slane %v1131, 1
        %v1160 = vsel %vm386, %v1157, %v1159
        %v1161 = vrot.slane %v1132, 1
        %v1162 = vsel %vm386, %v1159, %v1161
        %v1163 = vrot.slane %v1133, 1
        %v1164 = vsel %vm386, %v1161, %v1163
        %v1165 = vrot.slane %v1134, 1
        %v1166 = vsel %vm386, %v1163, %v1165
        %v1167 = vrot.slane %v1135, 1
        %v1168 = vsel %vm386, %v1165, %v1167
        %v1169 = vrot.slane %v1136, 1
        %v1170 = vsel %vm386, %v1167, %v1169
        %v1171 = vrot.slane %v1137, 1
        %v1172 = vsel %vm386, %v1169, %v1171
        %v1173 = vrot.slane %v1138, 1
        %v1174 = vsel %vm386, %v1171, %v1173
        %v1175 = vrot.slane %v1139, 1
        %v1176 = vsel %vm386, %v1173, %v1175
        %v1177 = vrot.slane %v1140, 1
        %v1178 = vsel %vm386, %v1175, %v1177
        %v1192 = vadd.f32 %v1115, %v1156
        %v1193 = vadd.f32 %v1116, %v1158
        %v1194 = vadd.f32 %v1117, %v1160
        %v1195 = vadd.f32 %v1118, %v1162
        %v1196 = vadd.f32 %v1119, %v1164
        %v1197 = vadd.f32 %v1120, %v1166
        %v1198 = vadd.f32 %v1121, %v1168
        %v1199 = vadd.f32 %v1122, %v1170
        %v1200 = vadd.f32 %v1123, %v1172
        %v1201 = vadd.f32 %v1124, %v1174
        %v1202 = vadd.f32 %v1125, %v1176
        %v1203 = vadd.f32 %v1126, %v1178
        %v1204 = vadd.f32 %v1127, %v1177
        %v1205 = vmul.f32 %v542, %v441
        %v1206 = vmul.f32 %v547, %v441
        %v1207 = vmul.f32 %v552, %v441
        %v1208 = vmul.f32 %v557, %v441
        %v1209 = vmul.f32 %v562, %v441
        %v1210 = vmul.f32 %v567, %v441
        %v1211 = vmul.f32 %v572, %v441
        %v1212 = vmul.f32 %v577, %v441
        %v1213 = vmul.f32 %v582, %v441
        %v1214 = vmul.f32 %v587, %v441
        %v1215 = vmul.f32 %v592, %v441
        %v1216 = vmul.f32 %v597, %v441
        %v1217 = vmul.f32 %v602, %v441
        %v1231 = vrot.slane %v1205, 2
        %v1232 = vrot.slane %v1206, 2
        %v1233 = vsel %vm469, %v1231, %v1232
        %v1234 = vrot.slane %v1207, 2
        %v1235 = vsel %vm469, %v1232, %v1234
        %v1236 = vrot.slane %v1208, 2
        %v1237 = vsel %vm469, %v1234, %v1236
        %v1238 = vrot.slane %v1209, 2
        %v1239 = vsel %vm469, %v1236, %v1238
        %v1240 = vrot.slane %v1210, 2
        %v1241 = vsel %vm469, %v1238, %v1240
        %v1242 = vrot.slane %v1211, 2
        %v1243 = vsel %vm469, %v1240, %v1242
        %v1244 = vrot.slane %v1212, 2
        %v1245 = vsel %vm469, %v1242, %v1244
        %v1246 = vrot.slane %v1213, 2
        %v1247 = vsel %vm469, %v1244, %v1246
        %v1248 = vrot.slane %v1214, 2
        %v1249 = vsel %vm469, %v1246, %v1248
        %v1250 = vrot.slane %v1215, 2
        %v1251 = vsel %vm469, %v1248, %v1250
        %v1252 = vrot.slane %v1216, 2
        %v1253 = vsel %vm469, %v1250, %v1252
        %v1254 = vrot.slane %v1217, 2
        %v1255 = vsel %vm469, %v1252, %v1254
        %v1269 = vadd.f32 %v1192, %v1233
        %v1270 = vadd.f32 %v1193, %v1235
        %v1271 = vadd.f32 %v1194, %v1237
        %v1272 = vadd.f32 %v1195, %v1239
        %v1273 = vadd.f32 %v1196, %v1241
        %v1274 = vadd.f32 %v1197, %v1243
        %v1275 = vadd.f32 %v1198, %v1245
        %v1276 = vadd.f32 %v1199, %v1247
        %v1277 = vadd.f32 %v1200, %v1249
        %v1278 = vadd.f32 %v1201, %v1251
        %v1279 = vadd.f32 %v1202, %v1253
        %v1280 = vadd.f32 %v1203, %v1255
        %v1281 = vadd.f32 %v1204, %v1254
        %v1282 = vmul.f32 %v818, %v605
        %v1283 = vmul.f32 %v823, %v605
        %v1284 = vmul.f32 %v828, %v605
        %v1285 = vmul.f32 %v833, %v605
        %v1286 = vmul.f32 %v838, %v605
        %v1287 = vmul.f32 %v843, %v605
        %v1288 = vmul.f32 %v848, %v605
        %v1289 = vmul.f32 %v853, %v605
        %v1290 = vmul.f32 %v858, %v605
        %v1291 = vmul.f32 %v863, %v605
        %v1292 = vmul.f32 %v868, %v605
        %v1293 = vmul.f32 %v873, %v605
        %v1294 = vmul.f32 %v878, %v605
        %v1295 = vadd.f32 %v1269, %v1282
        %v1296 = vadd.f32 %v1270, %v1283
        %v1297 = vadd.f32 %v1271, %v1284
        %v1298 = vadd.f32 %v1272, %v1285
        %v1299 = vadd.f32 %v1273, %v1286
        %v1300 = vadd.f32 %v1274, %v1287
        %v1301 = vadd.f32 %v1275, %v1288
        %v1302 = vadd.f32 %v1276, %v1289
        %v1303 = vadd.f32 %v1277, %v1290
        %v1304 = vadd.f32 %v1278, %v1291
        %v1305 = vadd.f32 %v1279, %v1292
        %v1306 = vadd.f32 %v1280, %v1293
        %v1307 = vadd.f32 %v1281, %v1294
        %v1308 = vmul.f32 %v818, %v636
        %v1309 = vmul.f32 %v823, %v636
        %v1310 = vmul.f32 %v828, %v636
        %v1311 = vmul.f32 %v833, %v636
        %v1312 = vmul.f32 %v838, %v636
        %v1313 = vmul.f32 %v843, %v636
        %v1314 = vmul.f32 %v848, %v636
        %v1315 = vmul.f32 %v853, %v636
        %v1316 = vmul.f32 %v858, %v636
        %v1317 = vmul.f32 %v863, %v636
        %v1318 = vmul.f32 %v868, %v636
        %v1319 = vmul.f32 %v873, %v636
        %v1320 = vmul.f32 %v878, %v636
        %v1334 = vrot.slane %v1308, 1
        %v1335 = vrot.slane %v1309, 1
        %v1336 = vsel %vm386, %v1334, %v1335
        %v1337 = vrot.slane %v1310, 1
        %v1338 = vsel %vm386, %v1335, %v1337
        %v1339 = vrot.slane %v1311, 1
        %v1340 = vsel %vm386, %v1337, %v1339
        %v1341 = vrot.slane %v1312, 1
        %v1342 = vsel %vm386, %v1339, %v1341
        %v1343 = vrot.slane %v1313, 1
        %v1344 = vsel %vm386, %v1341, %v1343
        %v1345 = vrot.slane %v1314, 1
        %v1346 = vsel %vm386, %v1343, %v1345
        %v1347 = vrot.slane %v1315, 1
        %v1348 = vsel %vm386, %v1345, %v1347
        %v1349 = vrot.slane %v1316, 1
        %v1350 = vsel %vm386, %v1347, %v1349
        %v1351 = vrot.slane %v1317, 1
        %v1352 = vsel %vm386, %v1349, %v1351
        %v1353 = vrot.slane %v1318, 1
        %v1354 = vsel %vm386, %v1351, %v1353
        %v1355 = vrot.slane %v1319, 1
        %v1356 = vsel %vm386, %v1353, %v1355
        %v1357 = vrot.slane %v1320, 1
        %v1358 = vsel %vm386, %v1355, %v1357
        %v1372 = vadd.f32 %v1295, %v1336
        %v1373 = vadd.f32 %v1296, %v1338
        %v1374 = vadd.f32 %v1297, %v1340
        %v1375 = vadd.f32 %v1298, %v1342
        %v1376 = vadd.f32 %v1299, %v1344
        %v1377 = vadd.f32 %v1300, %v1346
        %v1378 = vadd.f32 %v1301, %v1348
        %v1379 = vadd.f32 %v1302, %v1350
        %v1380 = vadd.f32 %v1303, %v1352
        %v1381 = vadd.f32 %v1304, %v1354
        %v1382 = vadd.f32 %v1305, %v1356
        %v1383 = vadd.f32 %v1306, %v1358
        %v1384 = vadd.f32 %v1307, %v1357
        %v1385 = vmul.f32 %v818, %v718
        %v1386 = vmul.f32 %v823, %v718
        %v1387 = vmul.f32 %v828, %v718
        %v1388 = vmul.f32 %v833, %v718
        %v1389 = vmul.f32 %v838, %v718
        %v1390 = vmul.f32 %v843, %v718
        %v1391 = vmul.f32 %v848, %v718
        %v1392 = vmul.f32 %v853, %v718
        %v1393 = vmul.f32 %v858, %v718
        %v1394 = vmul.f32 %v863, %v718
        %v1395 = vmul.f32 %v868, %v718
        %v1396 = vmul.f32 %v873, %v718
        %v1397 = vmul.f32 %v878, %v718
        %v1411 = vrot.slane %v1385, 2
        %v1412 = vrot.slane %v1386, 2
        %v1413 = vsel %vm469, %v1411, %v1412
        %v1414 = vrot.slane %v1387, 2
        %v1415 = vsel %vm469, %v1412, %v1414
        %v1416 = vrot.slane %v1388, 2
        %v1417 = vsel %vm469, %v1414, %v1416
        %v1418 = vrot.slane %v1389, 2
        %v1419 = vsel %vm469, %v1416, %v1418
        %v1420 = vrot.slane %v1390, 2
        %v1421 = vsel %vm469, %v1418, %v1420
        %v1422 = vrot.slane %v1391, 2
        %v1423 = vsel %vm469, %v1420, %v1422
        %v1424 = vrot.slane %v1392, 2
        %v1425 = vsel %vm469, %v1422, %v1424
        %v1426 = vrot.slane %v1393, 2
        %v1427 = vsel %vm469, %v1424, %v1426
        %v1428 = vrot.slane %v1394, 2
        %v1429 = vsel %vm469, %v1426, %v1428
        %v1430 = vrot.slane %v1395, 2
        %v1431 = vsel %vm469, %v1428, %v1430
        %v1432 = vrot.slane %v1396, 2
        %v1433 = vsel %vm469, %v1430, %v1432
        %v1434 = vrot.slane %v1397, 2
        %v1435 = vsel %vm469, %v1432, %v1434
        %v1449 = vadd.f32 %v1372, %v1413
        %v1450 = vadd.f32 %v1373, %v1415
        %v1451 = vadd.f32 %v1374, %v1417
        %v1452 = vadd.f32 %v1375, %v1419
        %v1453 = vadd.f32 %v1376, %v1421
        %v1454 = vadd.f32 %v1377, %v1423
        %v1455 = vadd.f32 %v1378, %v1425
        %v1456 = vadd.f32 %v1379, %v1427
        %v1457 = vadd.f32 %v1380, %v1429
        %v1458 = vadd.f32 %v1381, %v1431
        %v1459 = vadd.f32 %v1382, %v1433
        %v1460 = vadd.f32 %v1383, %v1435
        %v1461 = vadd.f32 %v1384, %v1434
        %s1462 = sadd.s32 %s244, 3
        %s1463 = smul.u32 %s1462, 104
        %s1464 = scalar_lea.vmem %s165, %s1463
        %v1465 = vld [vmem:[%s1464] sm:$0xff]
        %v1466 = vld [vmem:[%s1464 + $0x8] sm:$0xff]
        %v1467 = vld [vmem:[%s1464 + $0x10] sm:$0xff]
        %v1468 = vld [vmem:[%s1464 + $0x18] sm:$0xff]
        %v1469 = vld [vmem:[%s1464 + $0x20] sm:$0xff]
        %v1470 = vld [vmem:[%s1464 + $0x28] sm:$0xff]
        %v1471 = vld [vmem:[%s1464 + $0x30] sm:$0xff]
        %v1472 = vld [vmem:[%s1464 + $0x38] sm:$0xff]
        %v1473 = vld [vmem:[%s1464 + $0x40] sm:$0xff]
        %v1474 = vld [vmem:[%s1464 + $0x48] sm:$0xff]
        %v1475 = vld [vmem:[%s1464 + $0x50] sm:$0xff]
        %v1476 = vld [vmem:[%s1464 + $0x58] sm:$0xff]
        %v1477 = vld [vmem:[%s1464 + $0x60] sm:$0x3f]
        %1479 = vset.pattern.permute.xlu0 0
        %1480 = vperm.xlu0 %1479, %v1465
        %v1481 = vpop.permute.xlu0 %1480
        %1484 = vset.pattern.permute.xlu0 0
        %1485 = vperm.xlu0 %1484, %v1466
        %v1486 = vpop.permute.xlu0 %1485
        %1489 = vset.pattern.permute.xlu0 0
        %1490 = vperm.xlu0 %1489, %v1467
        %v1491 = vpop.permute.xlu0 %1490
        %1494 = vset.pattern.permute.xlu0 0
        %1495 = vperm.xlu0 %1494, %v1468
        %v1496 = vpop.permute.xlu0 %1495
        %1499 = vset.pattern.permute.xlu0 0
        %1500 = vperm.xlu0 %1499, %v1469
        %v1501 = vpop.permute.xlu0 %1500
        %1504 = vset.pattern.permute.xlu0 0
        %1505 = vperm.xlu0 %1504, %v1470
        %v1506 = vpop.permute.xlu0 %1505
        %1509 = vset.pattern.permute.xlu0 0
        %1510 = vperm.xlu0 %1509, %v1471
        %v1511 = vpop.permute.xlu0 %1510
        %1514 = vset.pattern.permute.xlu0 0
        %1515 = vperm.xlu0 %1514, %v1472
        %v1516 = vpop.permute.xlu0 %1515
        %1519 = vset.pattern.permute.xlu0 0
        %1520 = vperm.xlu0 %1519, %v1473
        %v1521 = vpop.permute.xlu0 %1520
        %1524 = vset.pattern.permute.xlu0 0
        %1525 = vperm.xlu0 %1524, %v1474
        %v1526 = vpop.permute.xlu0 %1525
        %1529 = vset.pattern.permute.xlu0 0
        %1530 = vperm.xlu0 %1529, %v1475
        %v1531 = vpop.permute.xlu0 %1530
        %1534 = vset.pattern.permute.xlu0 0
        %1535 = vperm.xlu0 %1534, %v1476
        %v1536 = vpop.permute.xlu0 %1535
        %1539 = vset.pattern.permute.xlu0 0
        %1540 = vperm.xlu0 %1539, %v1477
        %v1541 = vpop.permute.xlu0 %1540
        %v1543 = vmul.f32 %v1481, %v881
        %v1544 = vmul.f32 %v1486, %v881
        %v1545 = vmul.f32 %v1491, %v881
        %v1546 = vmul.f32 %v1496, %v881
        %v1547 = vmul.f32 %v1501, %v881
        %v1548 = vmul.f32 %v1506, %v881
        %v1549 = vmul.f32 %v1511, %v881
        %v1550 = vmul.f32 %v1516, %v881
        %v1551 = vmul.f32 %v1521, %v881
        %v1552 = vmul.f32 %v1526, %v881
        %v1553 = vmul.f32 %v1531, %v881
        %v1554 = vmul.f32 %v1536, %v881
        %v1555 = vmul.f32 %v1541, %v881
        %v1556 = vadd.f32 %v1449, %v1543
        %v1557 = vadd.f32 %v1450, %v1544
        %v1558 = vadd.f32 %v1451, %v1545
        %v1559 = vadd.f32 %v1452, %v1546
        %v1560 = vadd.f32 %v1453, %v1547
        %v1561 = vadd.f32 %v1454, %v1548
        %v1562 = vadd.f32 %v1455, %v1549
        %v1563 = vadd.f32 %v1456, %v1550
        %v1564 = vadd.f32 %v1457, %v1551
        %v1565 = vadd.f32 %v1458, %v1552
        %v1566 = vadd.f32 %v1459, %v1553
        %v1567 = vadd.f32 %v1460, %v1554
        %v1568 = vadd.f32 %v1461, %v1555
        %v1569 = vmul.f32 %v1481, %v912
        %v1570 = vmul.f32 %v1486, %v912
        %v1571 = vmul.f32 %v1491, %v912
        %v1572 = vmul.f32 %v1496, %v912
        %v1573 = vmul.f32 %v1501, %v912
        %v1574 = vmul.f32 %v1506, %v912
        %v1575 = vmul.f32 %v1511, %v912
        %v1576 = vmul.f32 %v1516, %v912
        %v1577 = vmul.f32 %v1521, %v912
        %v1578 = vmul.f32 %v1526, %v912
        %v1579 = vmul.f32 %v1531, %v912
        %v1580 = vmul.f32 %v1536, %v912
        %v1581 = vmul.f32 %v1541, %v912
        %v1595 = vrot.slane %v1569, 1
        %v1596 = vrot.slane %v1570, 1
        %v1597 = vsel %vm386, %v1595, %v1596
        %v1598 = vrot.slane %v1571, 1
        %v1599 = vsel %vm386, %v1596, %v1598
        %v1600 = vrot.slane %v1572, 1
        %v1601 = vsel %vm386, %v1598, %v1600
        %v1602 = vrot.slane %v1573, 1
        %v1603 = vsel %vm386, %v1600, %v1602
        %v1604 = vrot.slane %v1574, 1
        %v1605 = vsel %vm386, %v1602, %v1604
        %v1606 = vrot.slane %v1575, 1
        %v1607 = vsel %vm386, %v1604, %v1606
        %v1608 = vrot.slane %v1576, 1
        %v1609 = vsel %vm386, %v1606, %v1608
        %v1610 = vrot.slane %v1577, 1
        %v1611 = vsel %vm386, %v1608, %v1610
        %v1612 = vrot.slane %v1578, 1
        %v1613 = vsel %vm386, %v1610, %v1612
        %v1614 = vrot.slane %v1579, 1
        %v1615 = vsel %vm386, %v1612, %v1614
        %v1616 = vrot.slane %v1580, 1
        %v1617 = vsel %vm386, %v1614, %v1616
        %v1618 = vrot.slane %v1581, 1
        %v1619 = vsel %vm386, %v1616, %v1618
        %v1633 = vadd.f32 %v1556, %v1597
        %v1634 = vadd.f32 %v1557, %v1599
        %v1635 = vadd.f32 %v1558, %v1601
        %v1636 = vadd.f32 %v1559, %v1603
        %v1637 = vadd.f32 %v1560, %v1605
        %v1638 = vadd.f32 %v1561, %v1607
        %v1639 = vadd.f32 %v1562, %v1609
        %v1640 = vadd.f32 %v1563, %v1611
        %v1641 = vadd.f32 %v1564, %v1613
        %v1642 = vadd.f32 %v1565, %v1615
        %v1643 = vadd.f32 %v1566, %v1617
        %v1644 = vadd.f32 %v1567, %v1619
        %v1645 = vadd.f32 %v1568, %v1618
        %v1646 = vmul.f32 %v1481, %v994
        %v1647 = vmul.f32 %v1486, %v994
        %v1648 = vmul.f32 %v1491, %v994
        %v1649 = vmul.f32 %v1496, %v994
        %v1650 = vmul.f32 %v1501, %v994
        %v1651 = vmul.f32 %v1506, %v994
        %v1652 = vmul.f32 %v1511, %v994
        %v1653 = vmul.f32 %v1516, %v994
        %v1654 = vmul.f32 %v1521, %v994
        %v1655 = vmul.f32 %v1526, %v994
        %v1656 = vmul.f32 %v1531, %v994
        %v1657 = vmul.f32 %v1536, %v994
        %v1658 = vmul.f32 %v1541, %v994
        %v1672 = vrot.slane %v1646, 2
        %v1673 = vrot.slane %v1647, 2
        %v1674 = vsel %vm469, %v1672, %v1673
        %v1675 = vrot.slane %v1648, 2
        %v1676 = vsel %vm469, %v1673, %v1675
        %v1677 = vrot.slane %v1649, 2
        %v1678 = vsel %vm469, %v1675, %v1677
        %v1679 = vrot.slane %v1650, 2
        %v1680 = vsel %vm469, %v1677, %v1679
        %v1681 = vrot.slane %v1651, 2
        %v1682 = vsel %vm469, %v1679, %v1681
        %v1683 = vrot.slane %v1652, 2
        %v1684 = vsel %vm469, %v1681, %v1683
        %v1685 = vrot.slane %v1653, 2
        %v1686 = vsel %vm469, %v1683, %v1685
        %v1687 = vrot.slane %v1654, 2
        %v1688 = vsel %vm469, %v1685, %v1687
        %v1689 = vrot.slane %v1655, 2
        %v1690 = vsel %vm469, %v1687, %v1689
        %v1691 = vrot.slane %v1656, 2
        %v1692 = vsel %vm469, %v1689, %v1691
        %v1693 = vrot.slane %v1657, 2
        %v1694 = vsel %vm469, %v1691, %v1693
        %v1695 = vrot.slane %v1658, 2
        %v1696 = vsel %vm469, %v1693, %v1695
        %v1710 = vadd.f32 %v1633, %v1674
        %v1711 = vadd.f32 %v1634, %v1676
        %v1712 = vadd.f32 %v1635, %v1678
        %v1713 = vadd.f32 %v1636, %v1680
        %v1714 = vadd.f32 %v1637, %v1682
        %v1715 = vadd.f32 %v1638, %v1684
        %v1716 = vadd.f32 %v1639, %v1686
        %v1717 = vadd.f32 %v1640, %v1688
        %v1718 = vadd.f32 %v1641, %v1690
        %v1719 = vadd.f32 %v1642, %v1692
        %v1720 = vadd.f32 %v1643, %v1694
        %v1721 = vadd.f32 %v1644, %v1696
        %v1722 = vadd.f32 %v1645, %v1695
        %v1723 = vadd.f32 %v1710, %v1074
        %v1724 = vadd.f32 %v1711, %v1074
        %v1725 = vadd.f32 %v1712, %v1074
        %v1726 = vadd.f32 %v1713, %v1074
        %v1727 = vadd.f32 %v1714, %v1074
        %v1728 = vadd.f32 %v1715, %v1074
        %v1729 = vadd.f32 %v1716, %v1074
        %v1730 = vadd.f32 %v1717, %v1074
        %v1731 = vadd.f32 %v1718, %v1074
        %v1732 = vadd.f32 %v1719, %v1074
        %v1733 = vadd.f32 %v1720, %v1074
        %v1734 = vadd.f32 %v1721, %v1074
        %v1735 = vadd.f32 %v1722, %v1074
        %v1736 = vmax.f32 %v1723, 0.0
        %v1737 = vmax.f32 %v1724, 0.0
        %v1738 = vmax.f32 %v1725, 0.0
        %v1739 = vmax.f32 %v1726, 0.0
        %v1740 = vmax.f32 %v1727, 0.0
        %v1741 = vmax.f32 %v1728, 0.0
        %v1742 = vmax.f32 %v1729, 0.0
        %v1743 = vmax.f32 %v1730, 0.0
        %v1744 = vmax.f32 %v1731, 0.0
        %v1745 = vmax.f32 %v1732, 0.0
        %v1746 = vmax.f32 %v1733, 0.0
        %v1747 = vmax.f32 %v1734, 0.0
        %v1748 = vmax.f32 %v1735, 0.0
        %v1749 = vmax.f32 %v1089, %v1736
        %v1750 = vmax.f32 %v1090, %v1737
        %v1751 = vmax.f32 %v1091, %v1738
        %v1752 = vmax.f32 %v1092, %v1739
        %v1753 = vmax.f32 %v1093, %v1740
        %v1754 = vmax.f32 %v1094, %v1741
        %v1755 = vmax.f32 %v1095, %v1742
        %v1756 = vmax.f32 %v1096, %v1743
        %v1757 = vmax.f32 %v1097, %v1744
        %v1758 = vmax.f32 %v1098, %v1745
        %v1759 = vmax.f32 %v1099, %v1746
        %v1760 = vmax.f32 %v1100, %v1747
        %v1761 = vmax.f32 %v1101, %v1748
        %vm1762 = vcmask 818176
        %v1764 = vsel %vm1762, %v203, 0
        %v1767 = vsel %vm1762, %v204, 0
        %v1770 = vsel %vm1762, %v205, 0
        %v1773 = vsel %vm1762, %v206, 0
        %v1776 = vsel %vm1762, %v207, 0
        %v1779 = vsel %vm1762, %v208, 0
        %v1782 = vsel %vm1762, %v209, 0
        %vm1784 = vcmask 1043456
        %v1786 = vsel %vm1784, %v1761, 0
        %1788 = vmatpush.msra.mxu0 0.0
        %1789 = vmatpush.msra.mxu0 0.0
        %1790 = vmatpush.msra.mxu0 0.0
        %1791 = vmatpush.msra.mxu0 %v1786
        %1792 = vmatpush.msra.mxu0 %v1760
        %1793 = vmatpush.msra.mxu0 %v1759
        %1794 = vmatpush.msra.mxu0 %v1758
        %1795 = vmatpush.msra.mxu0 %v1757
        %1796 = vmatpush.msra.mxu0 %v1756
        %1797 = vmatpush.msra.mxu0 %v1755
        %1798 = vmatpush.msra.mxu0 %v1754
        %1799 = vmatpush.msra.mxu0 %v1753
        %1800 = vmatpush.msra.mxu0 %v1752
        %1801 = vmatpush.msra.mxu0 %v1751
        %1802 = vmatpush.msra.mxu0 %v1750
        %1803 = vmatpush.msra.mxu0 %v1749
        %1804 = vmatmul.f32.gmra.mxu0 %v1764
        %v1805 = vpop.f32.mrf.mxu0
        %v1806 = vadd.f32 0.0, %v1805
        %1807 = vmatmul.f32.gmra.mxu0 %v1767
        %v1808 = vpop.f32.mrf.mxu0
        %v1809 = vadd.f32 0.0, %v1808
        %1810 = vmatmul.f32.gmra.mxu0 %v1770
        %v1811 = vpop.f32.mrf.mxu0
        %v1812 = vadd.f32 0.0, %v1811
        %1813 = vmatmul.f32.gmra.mxu0 %v1773
        %v1814 = vpop.f32.mrf.mxu0
        %v1815 = vadd.f32 0.0, %v1814
        %1816 = vmatmul.f32.gmra.mxu0 %v1776
        %v1817 = vpop.f32.mrf.mxu0
        %v1818 = vadd.f32 0.0, %v1817
        %1819 = vmatmul.f32.gmra.mxu0 %v1779
        %v1820 = vpop.f32.mrf.mxu0
        %v1821 = vadd.f32 0.0, %v1820
        %1822 = vmatmul.f32.gmra.mxu0 %v1782
        %v1823 = vpop.f32.mrf.mxu0
        %v1824 = vadd.f32 0.0, %v1823
        %1825 = vdwg.mxu0
        %v1827 = vsel %vm1762, %v231, 0
        %v1830 = vsel %vm1762, %v232, 0
        %v1833 = vsel %vm1762, %v233, 0
        %v1836 = vsel %vm1762, %v234, 0
        %v1839 = vsel %vm1762, %v235, 0
        %v1842 = vsel %vm1762, %v236, 0
        %v1845 = vsel %vm1762, %v237, 0
        %1847 = vmatpush.msra.mxu0 0.0
        %1848 = vmatpush.msra.mxu0 0.0
        %1849 = vmatpush.msra.mxu0 0.0
        %1850 = vmatpush.msra.mxu0 %v1786
        %1851 = vmatpush.msra.mxu0 %v1760
        %1852 = vmatpush.msra.mxu0 %v1759
        %1853 = vmatpush.msra.mxu0 %v1758
        %1854 = vmatpush.msra.mxu0 %v1757
        %1855 = vmatpush.msra.mxu0 %v1756
        %1856 = vmatpush.msra.mxu0 %v1755
        %1857 = vmatpush.msra.mxu0 %v1754
        %1858 = vmatpush.msra.mxu0 %v1753
        %1859 = vmatpush.msra.mxu0 %v1752
        %1860 = vmatpush.msra.mxu0 %v1751
        %1861 = vmatpush.msra.mxu0 %v1750
        %1862 = vmatpush.msra.mxu0 %v1749
        %1863 = vmatmul.f32.gmra.mxu0 %v1827
        %v1864 = vpop.f32.mrf.mxu0
        %v1865 = vadd.f32 0.0, %v1864
        %1866 = vmatmul.f32.gmra.mxu0 %v1830
        %v1867 = vpop.f32.mrf.mxu0
        %v1868 = vadd.f32 0.0, %v1867
        %1869 = vmatmul.f32.gmra.mxu0 %v1833
        %v1870 = vpop.f32.mrf.mxu0
        %v1871 = vadd.f32 0.0, %v1870
        %1872 = vmatmul.f32.gmra.mxu0 %v1836
        %v1873 = vpop.f32.mrf.mxu0
        %v1874 = vadd.f32 0.0, %v1873
        %1875 = vmatmul.f32.gmra.mxu0 %v1839
        %v1876 = vpop.f32.mrf.mxu0
        %v1877 = vadd.f32 0.0, %v1876
        %1878 = vmatmul.f32.gmra.mxu0 %v1842
        %v1879 = vpop.f32.mrf.mxu0
        %v1880 = vadd.f32 0.0, %v1879
        %1881 = vmatmul.f32.gmra.mxu0 %v1845
        %v1882 = vpop.f32.mrf.mxu0
        %v1883 = vadd.f32 0.0, %v1882
        %1884 = vdwg.mxu0
        %v1885 = vmax.f32 %v1806, %v1865
        %v1886 = vmax.f32 %v1809, %v1868
        %v1887 = vmax.f32 %v1812, %v1871
        %v1888 = vmax.f32 %v1815, %v1874
        %v1889 = vmax.f32 %v1818, %v1877
        %v1890 = vmax.f32 %v1821, %v1880
        %v1891 = vmax.f32 %v1824, %v1883
        %s1892 = smul.u32 %s239, 56
        %s1893 = scalar_lea.vmem %s170, %s1892
        %vm1894 = vcmask 392192
        %1895 = vst.msk [vmem:[%s1893] sm:$0xff] %vm1894, %v1885
        %1896 = vst.msk [vmem:[%s1893 + $0x8] sm:$0xff] %vm1894, %v1886
        %1897 = vst.msk [vmem:[%s1893 + $0x10] sm:$0xff] %vm1894, %v1887
        %1898 = vst.msk [vmem:[%s1893 + $0x18] sm:$0xff] %vm1894, %v1888
        %1899 = vst.msk [vmem:[%s1893 + $0x20] sm:$0xff] %vm1894, %v1889
        %1900 = vst.msk [vmem:[%s1893 + $0x28] sm:$0xff] %vm1894, %v1890
        %vm1901 = vcmask 386048
        %1902 = vst.msk [vmem:[%s1893 + $0x30] sm:$0x3] %vm1901, %v1891
      $region37: #{tpu_custom_call.1} parent=31 // loop_footer
        %s243 = sadd.s32 1, %s239
      $region38: #{tpu_custom_call.1} parent=31 // loop_footer_branch
        %238 = sbr.rel target = $region34
      $region39: #{tpu_custom_call.1} parent=31 // loop_exit
        _
      %p1903 = scmp.lt.s32.totalorder %s14, 1
      %s1904 = scalar_select %p1903, %s14, 1
      %s1905 = smul.addr %s1904, 112
      %s1906 = smul.addr %s1905, 8
      %s1907 = scalar_lea.vmem %s3, %s1906
      // Predicated region
      $region40: #{tpu_custom_call.1} parent=31 // pred_check
        %p1908 = pneg %p100
      $region41: #{tpu_custom_call.1} parent=31 // pred_check_branch
        %1910 = sbr.rel (%p1908) target = $region43
      $region42: #{tpu_custom_call.1} parent=31 // pred_region
        _
      $region43: #{tpu_custom_call.1} parent=31 // pred_fallthru
        _
    $region32: #{tpu_custom_call.1} parent=5 // pred_fallthru
      _
    %p1911 = scmp.le.s32.totalorder 2, %s9
    // Predicated region
    $region44: #{tpu_custom_call.1} parent=5 // pred_check
      %p1912 = pneg %p1911
    $region45: #{tpu_custom_call.1} parent=5 // pred_check_branch
      %1914 = sbr.rel (%p1912) target = $region47
    $region46: #{tpu_custom_call.1} parent=5 // pred_region
      %s1915 = ssub.s32 %s9, 2
      // Predicated region
      $region48: #{tpu_custom_call.1} parent=46 // pred_check
        %p1916 = pneg %p106
      $region49: #{tpu_custom_call.1} parent=46 // pred_check_branch
        %1918 = sbr.rel (%p1916) target = $region51
      $region50: #{tpu_custom_call.1} parent=46 // pred_region
        %p1919 = scmp.lt.s32.totalorder %s15, 1
        %s1920 = scalar_select %p1919, %s15, 1
        %s1921 = smul.addr %s1920, 112
        %s1922 = smul.addr %s1921, 8
        %s1923 = scalar_lea.vmem %s3, %s1922
      $region51: #{tpu_custom_call.1} parent=46 // pred_fallthru
        _
    $region47: #{tpu_custom_call.1} parent=5 // pred_fallthru
      _
  $region6: #{tpu_custom_call.1} parent=0 // loop_footer
    %s13 = sadd.s32 1, %s9
  $region7: #{tpu_custom_call.1} parent=0 // loop_footer_branch
    %8 = sbr.rel target = $region3
  $region8: #{tpu_custom_call.1} parent=0 // loop_exit
    _

</llo_original>
